<compile_context>
chip_gen: v7x
topology: tpu7x:2x2x1
jax: 0.10.0
libtpu: 0.0.40
codegen_flags: <defaults>
</compile_context>

<pallas_src>
import jax
import jax.numpy as jnp
from jax.experimental import pallas as pl
from jax.experimental.pallas import tpu as pltpu


def _round_up(x, m):
    return (x + m - 1) // m * m


# ----------------------------------------------------------------------------
# Pallas kernel: GRU step + dot-attention + context + concat/tanh + out/softmax
# ----------------------------------------------------------------------------
def luong_decoder_kernel(
    emb_ref,        # (Bp, Hp)       embedded input (dropout = identity, eval)
    h_ref,          # (Bp, Hp)       previous hidden
    enc_ref,        # (Bp, Sp, Hp)   encoder outputs (batch-major)
    smask_ref,      # (1, Sp)        0 for valid src positions, -1e30 for pad
    wih_ref,        # (Hp, 3Hp)      fused W_ih^T  [r | z | n]
    whh_ref,        # (Hp, 3Hp)      fused W_hh^T  [r | z | n]
    gb_ref,         # (4, Hp)        rows: b_r (=bir+bhr), b_z (=biz+bhz), b_in, b_hn
    wc_ref,         # (2Hp, Hp)      concat-linear weight^T (rows: h_new part, context part)
    bc_ref,         # (1, Hp)
    wo_ref,         # (Hp, Vp)       out weight^T
    bo_ref,         # (1, Vp)        out bias (-1e30 on padded vocab lanes)
    out_ref,        # (Bp, Vp)       softmax over vocab
    hid_ref,        # (Bp, Hp)       new hidden
):
    f32 = jnp.float32
    Hp = h_ref.shape[-1]
    dot = lambda a, b: jnp.dot(a, b, preferred_element_type=f32)

    x = emb_ref[...].astype(f32)
    h = h_ref[...].astype(f32)

    # ---- GRU cell, gate-fused (PyTorch ordering r, z, n) ----
    gi = dot(x, wih_ref[...])                    # (Bp, 3Hp)
    gh = dot(h, whh_ref[...])                    # (Bp, 3Hp)

    r = jax.nn.sigmoid(gi[:, :Hp] + gh[:, :Hp] + gb_ref[0:1, :])
    z = jax.nn.sigmoid(gi[:, Hp:2 * Hp] + gh[:, Hp:2 * Hp] + gb_ref[1:2, :])
    n = jnp.tanh(gi[:, 2 * Hp:] + gb_ref[2:3, :]
                 + r * (gh[:, 2 * Hp:] + gb_ref[3:4, :]))
    h_new = (1.0 - z) * n + z * h                # (Bp, Hp) == rnn_output == new hidden

    # ---- Luong 'dot' attention on the MXU ----
    enc = enc_ref[...].astype(f32)               # (Bp, Sp, Hp)
    scores = jnp.einsum('bqh,bsh->bqs', h_new[:, None, :], enc,
                        preferred_element_type=f32)            # (Bp, 1, Sp)
    scores = scores + smask_ref[...].reshape(1, 1, -1)          # mask padded src
    m = jnp.max(scores, axis=-1, keepdims=True)
    e = jnp.exp(scores - m)
    attn = e * pl.reciprocal(jnp.sum(e, axis=-1, keepdims=True), approx=True)

    context = jnp.einsum('bqs,bsh->bqh', attn, enc,
                         preferred_element_type=f32)[:, 0, :]   # (Bp, Hp)

    # ---- concat linear + tanh (single fused matmul, K = 2*Hp) ----
    concat_in = jnp.concatenate([h_new, context], axis=-1)      # (Bp, 2Hp)
    concat_out = jnp.tanh(dot(concat_in, wc_ref[...]) + bc_ref[...])

    # ---- output projection + softmax over vocab ----
    logits = dot(concat_out, wo_ref[...]) + bo_ref[...]         # (Bp, Vp)
    lm = jnp.max(logits, axis=-1, keepdims=True)
    le = jnp.exp(logits - lm)
    probs = le * pl.reciprocal(jnp.sum(le, axis=-1, keepdims=True), approx=True)

    out_ref[...] = probs.astype(out_ref.dtype)
    hid_ref[...] = h_new.astype(hid_ref.dtype)


# ----------------------------------------------------------------------------
# One-time parameter preprocessing (hoisted out of the decode step)
# ----------------------------------------------------------------------------
def prepare_decoder_params(params, lane=128):
    """Pre-transpose / fuse / pad all weights once. Do NOT call per decode step."""
    f32 = jnp.float32
    V, H = params["out_w"].shape          # out: (V, H)
    Hp = _round_up(H, lane)
    Vp = _round_up(V, lane)

    def pad2(x, r, c, value=0.0):
        return jnp.pad(x.astype(f32), ((0, r - x.shape[0]), (0, c - x.shape[1])),
                       constant_values=value)

    def padv(v, n, value=0.0):
        return jnp.pad(v.astype(f32), (0, n - v.shape[0]), constant_values=value)

    # Embedding: pad the feature (lane) dim only; rows are gathered in the wrapper.
    emb = jnp.pad(params["embedding"].astype(f32), ((0, 0), (0, Hp - H)))

    # GRU: fuse the three per-gate (H,H) transposed blocks into (Hp, 3Hp).
    def fuse_gates(w):                                       # w: (3H, H)
        blocks = [pad2(w[g * H:(g + 1) * H].T, Hp, Hp) for g in range(3)]
        return jnp.concatenate(blocks, axis=1)               # (Hp, 3Hp)

    wih_t = fuse_gates(params["gru_w_ih"])
    whh_t = fuse_gates(params["gru_w_hh"])

    b_ih, b_hh = params["gru_b_ih"], params["gru_b_hh"]
    gru_b = jnp.stack([
        padv(b_ih[:H] + b_hh[:H], Hp),                       # b_r  (folded)
        padv(b_ih[H:2 * H] + b_hh[H:2 * H], Hp),             # b_z  (folded)
        padv(b_ih[2 * H:], Hp),                              # b_in
        padv(b_hh[2 * H:], Hp),                              # b_hn (inside r*(...))
    ], axis=0)                                               # (4, Hp)

    # Concat linear: W (H, 2H) -> W^T (2H, H), padded & stacked per half.
    wc = params["concat_w"]
    wc_t = jnp.concatenate([pad2(wc[:, :H].T, Hp, Hp),
                            pad2(wc[:, H:].T, Hp, Hp)], axis=0)   # (2Hp, Hp)
    bc = padv(params["concat_b"], Hp)[None]                       # (1, Hp)

    # Output projection: W (V, H) -> W^T (H, V) padded; padded vocab gets -1e30 bias.
    wo_t = pad2(params["out_w"].T, Hp, Vp)                        # (Hp, Vp)
    bo = padv(params["out_b"], Vp, value=-1e30)[None]             # (1, Vp)

    return dict(H=H, V=V, H_pad=Hp, V_pad=Vp,
                embedding=emb, wih_t=wih_t, whh_t=whh_t, gru_b=gru_b,
                wc_t=wc_t, bc=bc, wo_t=wo_t, bo=bo)


# ----------------------------------------------------------------------------
# Per-step wrapper (glue only: embedding gather, padding, pallas_call)
# ----------------------------------------------------------------------------
def luong_attn_decoder_step(input_step, last_hidden, encoder_outputs, prepped):
    """
    input_step      : (1, B) int32 token ids
    last_hidden     : (n_layers=1, B, H) float32
    encoder_outputs : (S, B, H) float32
    prepped         : output of prepare_decoder_params()
    returns (output (B, V), hidden (1, B, H))
    """
    f32 = jnp.float32
    H, V = prepped["H"], prepped["V"]
    Hp, Vp = prepped["H_pad"], prepped["V_pad"]
    B = input_step.shape[1]
    S = encoder_outputs.shape[0]
    Bp = _round_up(B, 8)
    Sp = _round_up(S, 8)

    # Embedding lookup (gather); embedding_dropout is identity in eval mode.
    embedded = jnp.take(prepped["embedding"], input_step[0], axis=0)      # (B, Hp)
    emb_p = jnp.pad(embedded, ((0, Bp - B), (0, 0)))

    h_prev = last_hidden[0].astype(f32)                                   # (B, H)
    h_p = jnp.pad(h_prev, ((0, Bp - B), (0, Hp - H)))

    enc = jnp.transpose(encoder_outputs, (1, 0, 2)).astype(f32)           # (B, S, H)
    enc_p = jnp.pad(enc, ((0, Bp - B), (0, Sp - S), (0, Hp - H)))

    # Additive mask for S-padding (all zeros when S is already aligned).
    smask = jnp.where(jnp.arange(Sp) < S, 0.0, -1e30).astype(f32)[None]   # (1, Sp)

    inputs = (emb_p, h_p, enc_p, smask,
              prepped["wih_t"], prepped["whh_t"], prepped["gru_b"],
              prepped["wc_t"], prepped["bc"], prepped["wo_t"], prepped["bo"])

    vmem = lambda: pl.BlockSpec(memory_space=pltpu.MemorySpace.VMEM)

    out_p, hid_p = pl.pallas_call(
        luong_decoder_kernel,
        out_shape=(
            jax.ShapeDtypeStruct((Bp, Vp), f32),
            jax.ShapeDtypeStruct((Bp, Hp), f32),
        ),
        in_specs=[vmem() for _ in inputs],
        out_specs=(vmem(), vmem()),
        input_output_aliases={1: 1},    # reuse padded h_prev buffer for new hidden
    )(*inputs)

    output = out_p[:B, :V]                                   # (B, V)
    hidden = hid_p[:B, :H][None]                             # (1, B, H)
    return output, hidden


# ----------------------------------------------------------------------------
# Deterministic parameter construction (synthetic, no checkpoint)
# ----------------------------------------------------------------------------
def make_params(key, hidden_size, output_size):
    ks = jax.random.split(key, 9)
    scale = 0.1
    return {
        "embedding": scale * jax.random.normal(ks[0], (output_size, hidden_size), jnp.float32),
        "gru_w_ih":  scale * jax.random.normal(ks[1], (3 * hidden_size, hidden_size), jnp.float32),
        "gru_w_hh":  scale * jax.random.normal(ks[2], (3 * hidden_size, hidden_size), jnp.float32),
        "gru_b_ih":  scale * jax.random.normal(ks[3], (3 * hidden_size,), jnp.float32),
        "gru_b_hh":  scale * jax.random.normal(ks[4], (3 * hidden_size,), jnp.float32),
        "concat_w":  scale * jax.random.normal(ks[5], (hidden_size, 2 * hidden_size), jnp.float32),
        "concat_b":  scale * jax.random.normal(ks[6], (hidden_size,), jnp.float32),
        "out_w":     scale * jax.random.normal(ks[7], (output_size, hidden_size), jnp.float32),
        "out_b":     scale * jax.random.normal(ks[8], (output_size,), jnp.float32),
    }


if __name__ == "__main__":
    B, S, H, V = 2, 8, 32, 64       # batch, src seq len, hidden, vocab/output_size
    key = jax.random.PRNGKey(0)
    k_par, k_inp, k_hid, k_enc = jax.random.split(key, 4)

    params = make_params(k_par, H, V)
    prepped = prepare_decoder_params(params)     # one-time weight prep (hoisted)

    input_step = jax.random.randint(k_inp, (1, B), 0, V, dtype=jnp.int32)   # (1, B)
    last_hidden = jax.random.normal(k_hid, (1, B, H), jnp.float32)          # (1, B, H)
    encoder_outputs = jax.random.normal(k_enc, (S, B, H), jnp.float32)      # (S, B, H)

    step = jax.jit(lambda i, h, e: luong_attn_decoder_step(i, h, e, prepped))
    output, hidden = step(input_step, last_hidden, encoder_outputs)
    jax.block_until_ready((output, hidden))

    assert output.shape == (B, V)
    assert hidden.shape == (1, B, H)
    # softmax rows sum to ~1 (approx-reciprocal denominator)
    assert bool(jnp.all(jnp.abs(jnp.sum(output, axis=1) - 1.0) < 5e-3))
    assert bool(jnp.all(jnp.isfinite(hidden)))
    print("KERNEL_OK")
</pallas_src>

<mosaic_0001>
module attributes {stable_mosaic.version = 11 : i64} {
  func.func @luong_decoder_kernel(%arg0: memref<8x128xf32, #tpu.memory_space<vmem>>, %arg1: memref<8x128xf32, #tpu.memory_space<vmem>>, %arg2: memref<8x8x128xf32, #tpu.memory_space<vmem>>, %arg3: memref<1x8xf32, #tpu.memory_space<vmem>>, %arg4: memref<128x384xf32, #tpu.memory_space<vmem>>, %arg5: memref<128x384xf32, #tpu.memory_space<vmem>>, %arg6: memref<4x128xf32, #tpu.memory_space<vmem>>, %arg7: memref<256x128xf32, #tpu.memory_space<vmem>>, %arg8: memref<1x128xf32, #tpu.memory_space<vmem>>, %arg9: memref<128x128xf32, #tpu.memory_space<vmem>>, %arg10: memref<1x128xf32, #tpu.memory_space<vmem>>, %arg11: memref<8x128xf32, #tpu.memory_space<vmem>>, %arg12: memref<8x128xf32, #tpu.memory_space<vmem>>) attributes {dimension_semantics = [], scalar_prefetch = 0 : i64, scratch_operands = 0 : i64, tpu.core_type = #tpu.core_type<tc>} {
    %c0 = arith.constant 0 : index
    %c0_0 = arith.constant 0 : index
    %0 = vector.load %arg0[%c0, %c0_0] : memref<8x128xf32, #tpu.memory_space<vmem>>, vector<8x128xf32>
    %c0_1 = arith.constant 0 : index
    %c0_2 = arith.constant 0 : index
    %1 = vector.load %arg1[%c0_1, %c0_2] : memref<8x128xf32, #tpu.memory_space<vmem>>, vector<8x128xf32>
    %c0_3 = arith.constant 0 : index
    %c0_4 = arith.constant 0 : index
    %2 = vector.load %arg4[%c0_3, %c0_4] : memref<128x384xf32, #tpu.memory_space<vmem>>, vector<128x384xf32>
    %cst = arith.constant dense<0.000000e+00> : vector<8x384xf32>
    %3 = tpu.matmul %0, %2, %cst {dimension_numbers = #tpu.dot_dimension_numbers<[1], [0], [0], [1], [0, 0, 1, 1], [], []>} : vector<8x128xf32>, vector<128x384xf32>, vector<8x384xf32> -> vector<8x384xf32>
    %c0_5 = arith.constant 0 : index
    %c0_6 = arith.constant 0 : index
    %4 = vector.load %arg5[%c0_5, %c0_6] : memref<128x384xf32, #tpu.memory_space<vmem>>, vector<128x384xf32>
    %cst_7 = arith.constant dense<0.000000e+00> : vector<8x384xf32>
    %5 = tpu.matmul %1, %4, %cst_7 {dimension_numbers = #tpu.dot_dimension_numbers<[1], [0], [0], [1], [0, 0, 1, 1], [], []>} : vector<8x128xf32>, vector<128x384xf32>, vector<8x384xf32> -> vector<8x384xf32>
    %6 = vector.extract_strided_slice %3 {offsets = [0, 0], sizes = [8, 128], strides = [1, 1]} : vector<8x384xf32> to vector<8x128xf32>
    %7 = vector.extract_strided_slice %5 {offsets = [0, 0], sizes = [8, 128], strides = [1, 1]} : vector<8x384xf32> to vector<8x128xf32>
    %8 = arith.addf %6, %7 : vector<8x128xf32>
    %c0_8 = arith.constant 0 : index
    %c0_9 = arith.constant 0 : index
    %9 = vector.load %arg6[%c0_8, %c0_9] : memref<4x128xf32, #tpu.memory_space<vmem>>, vector<1x128xf32>
    %10 = vector.broadcast %9 : vector<1x128xf32> to vector<8x128xf32>
    %11 = arith.addf %8, %10 : vector<8x128xf32>
    %12 = arith.negf %11 : vector<8x128xf32>
    %13 = math.exp %12 : vector<8x128xf32>
    %cst_10 = arith.constant 1.000000e+00 : f32
    %14 = vector.broadcast %cst_10 : f32 to vector<8x128xf32>
    %15 = arith.addf %14, %13 : vector<8x128xf32>
    %16 = arith.divf %14, %15 : vector<8x128xf32>
    %17 = vector.extract_strided_slice %3 {offsets = [0, 128], sizes = [8, 128], strides = [1, 1]} : vector<8x384xf32> to vector<8x128xf32>
    %18 = vector.extract_strided_slice %5 {offsets = [0, 128], sizes = [8, 128], strides = [1, 1]} : vector<8x384xf32> to vector<8x128xf32>
    %19 = arith.addf %17, %18 : vector<8x128xf32>
    %c1 = arith.constant 1 : index
    %c0_11 = arith.constant 0 : index
    %20 = vector.load %arg6[%c1, %c0_11] : memref<4x128xf32, #tpu.memory_space<vmem>>, vector<1x128xf32>
    %21 = vector.broadcast %20 : vector<1x128xf32> to vector<8x128xf32>
    %22 = arith.addf %19, %21 : vector<8x128xf32>
    %23 = arith.negf %22 : vector<8x128xf32>
    %24 = math.exp %23 : vector<8x128xf32>
    %cst_12 = arith.constant 1.000000e+00 : f32
    %25 = vector.broadcast %cst_12 : f32 to vector<8x128xf32>
    %26 = arith.addf %25, %24 : vector<8x128xf32>
    %27 = arith.divf %25, %26 : vector<8x128xf32>
    %28 = vector.extract_strided_slice %3 {offsets = [0, 256], sizes = [8, 128], strides = [1, 1]} : vector<8x384xf32> to vector<8x128xf32>
    %c2 = arith.constant 2 : index
    %c0_13 = arith.constant 0 : index
    %29 = vector.load %arg6[%c2, %c0_13] : memref<4x128xf32, #tpu.memory_space<vmem>>, vector<1x128xf32>
    %30 = vector.broadcast %29 : vector<1x128xf32> to vector<8x128xf32>
    %31 = arith.addf %28, %30 : vector<8x128xf32>
    %32 = vector.extract_strided_slice %5 {offsets = [0, 256], sizes = [8, 128], strides = [1, 1]} : vector<8x384xf32> to vector<8x128xf32>
    %c3 = arith.constant 3 : index
    %c0_14 = arith.constant 0 : index
    %33 = vector.load %arg6[%c3, %c0_14] : memref<4x128xf32, #tpu.memory_space<vmem>>, vector<1x128xf32>
    %34 = vector.broadcast %33 : vector<1x128xf32> to vector<8x128xf32>
    %35 = arith.addf %32, %34 : vector<8x128xf32>
    %36 = arith.mulf %16, %35 : vector<8x128xf32>
    %37 = arith.addf %31, %36 : vector<8x128xf32>
    %38 = math.tanh %37 : vector<8x128xf32>
    %cst_15 = arith.constant 1.000000e+00 : f32
    %39 = vector.broadcast %cst_15 : f32 to vector<8x128xf32>
    %40 = arith.subf %39, %27 : vector<8x128xf32>
    %41 = arith.mulf %40, %38 : vector<8x128xf32>
    %42 = arith.mulf %27, %1 : vector<8x128xf32>
    %43 = arith.addf %41, %42 : vector<8x128xf32>
    %c0_16 = arith.constant 0 : index
    %c0_17 = arith.constant 0 : index
    %c0_18 = arith.constant 0 : index
    %44 = vector.load %arg2[%c0_16, %c0_17, %c0_18] : memref<8x8x128xf32, #tpu.memory_space<vmem>>, vector<8x8x128xf32>
    %45 = vector.shape_cast %43 : vector<8x128xf32> to vector<8x1x128xf32>
    "tpu.trace_start"() <{level = 10 : i32, message = "bqh,bsh->bqs"}> : () -> ()
    %cst_19 = arith.constant dense<0.000000e+00> : vector<8x1x8xf32>
    %46 = tpu.matmul %45, %44, %cst_19 {dimension_numbers = #tpu.dot_dimension_numbers<[2], [2], [1], [1], [0, 0, 0, 1, 1, 1], [0], [0]>} : vector<8x1x128xf32>, vector<8x8x128xf32>, vector<8x1x8xf32> -> vector<8x1x8xf32>
    "tpu.trace_stop"() : () -> ()
    %c0_20 = arith.constant 0 : index
    %c0_21 = arith.constant 0 : index
    %47 = vector.load %arg3[%c0_20, %c0_21] : memref<1x8xf32, #tpu.memory_space<vmem>>, vector<1x8xf32>
    %48 = vector.shape_cast %47 : vector<1x8xf32> to vector<1x1x8xf32>
    %49 = vector.broadcast %48 : vector<1x1x8xf32> to vector<8x1x8xf32>
    %50 = arith.addf %46, %49 : vector<8x1x8xf32>
    %cst_22 = arith.constant dense<0xFF800000> : vector<8x1xf32>
    %51 = vector.multi_reduction <maximumf>, %50, %cst_22 [2] : vector<8x1x8xf32> to vector<8x1xf32>
    %52 = vector.shape_cast %51 : vector<8x1xf32> to vector<8x1x1xf32>
    %53 = vector.broadcast %52 : vector<8x1x1xf32> to vector<8x1x8xf32>
    %54 = arith.subf %50, %53 : vector<8x1x8xf32>
    %55 = math.exp %54 : vector<8x1x8xf32>
    %cst_23 = arith.constant dense<0.000000e+00> : vector<8x1xf32>
    %56 = vector.multi_reduction <add>, %55, %cst_23 [2] : vector<8x1x8xf32> to vector<8x1xf32>
    %57 = vector.shape_cast %56 : vector<8x1xf32> to vector<8x1x1xf32>
    %58 = tpu.reciprocal %57 {approx = true} : vector<8x1x1xf32> -> vector<8x1x1xf32>
    %59 = vector.broadcast %58 : vector<8x1x1xf32> to vector<8x1x8xf32>
    %60 = arith.mulf %55, %59 : vector<8x1x8xf32>
    "tpu.trace_start"() <{level = 10 : i32, message = "bqs,bsh->bqh"}> : () -> ()
    %cst_24 = arith.constant dense<0.000000e+00> : vector<8x1x128xf32>
    %61 = tpu.matmul %60, %44, %cst_24 {dimension_numbers = #tpu.dot_dimension_numbers<[2], [1], [1], [2], [0, 0, 0, 1, 1, 2], [0], [0]>} : vector<8x1x8xf32>, vector<8x8x128xf32>, vector<8x1x128xf32> -> vector<8x1x128xf32>
    "tpu.trace_stop"() : () -> ()
    %62 = vector.shape_cast %61 : vector<8x1x128xf32> to vector<8x128xf32>
    %63 = tpu.concatenate %43, %62 in 1 : vector<8x128xf32>, vector<8x128xf32> -> vector<8x256xf32>
    %c0_25 = arith.constant 0 : index
    %c0_26 = arith.constant 0 : index
    %64 = vector.load %arg7[%c0_25, %c0_26] : memref<256x128xf32, #tpu.memory_space<vmem>>, vector<256x128xf32>
    %cst_27 = arith.constant dense<0.000000e+00> : vector<8x128xf32>
    %65 = tpu.matmul %63, %64, %cst_27 {dimension_numbers = #tpu.dot_dimension_numbers<[1], [0], [0], [1], [0, 0, 1, 1], [], []>} : vector<8x256xf32>, vector<256x128xf32>, vector<8x128xf32> -> vector<8x128xf32>
    %c0_28 = arith.constant 0 : index
    %c0_29 = arith.constant 0 : index
    %66 = vector.load %arg8[%c0_28, %c0_29] : memref<1x128xf32, #tpu.memory_space<vmem>>, vector<1x128xf32>
    %67 = vector.broadcast %66 : vector<1x128xf32> to vector<8x128xf32>
    %68 = arith.addf %65, %67 : vector<8x128xf32>
    %69 = math.tanh %68 : vector<8x128xf32>
    %c0_30 = arith.constant 0 : index
    %c0_31 = arith.constant 0 : index
    %70 = vector.load %arg9[%c0_30, %c0_31] : memref<128x128xf32, #tpu.memory_space<vmem>>, vector<128x128xf32>
    %cst_32 = arith.constant dense<0.000000e+00> : vector<8x128xf32>
    %71 = tpu.matmul %69, %70, %cst_32 {dimension_numbers = #tpu.dot_dimension_numbers<[1], [0], [0], [1], [0, 0, 1, 1], [], []>} : vector<8x128xf32>, vector<128x128xf32>, vector<8x128xf32> -> vector<8x128xf32>
    %c0_33 = arith.constant 0 : index
    %c0_34 = arith.constant 0 : index
    %72 = vector.load %arg10[%c0_33, %c0_34] : memref<1x128xf32, #tpu.memory_space<vmem>>, vector<1x128xf32>
    %73 = vector.broadcast %72 : vector<1x128xf32> to vector<8x128xf32>
    %74 = arith.addf %71, %73 : vector<8x128xf32>
    %cst_35 = arith.constant dense<0xFF800000> : vector<8xf32>
    %75 = vector.multi_reduction <maximumf>, %74, %cst_35 [1] : vector<8x128xf32> to vector<8xf32>
    %76 = vector.shape_cast %75 : vector<8xf32> to vector<8x1xf32>
    %77 = vector.broadcast %76 : vector<8x1xf32> to vector<8x128xf32>
    %78 = arith.subf %74, %77 : vector<8x128xf32>
    %79 = math.exp %78 : vector<8x128xf32>
    %cst_36 = arith.constant dense<0.000000e+00> : vector<8xf32>
    %80 = vector.multi_reduction <add>, %79, %cst_36 [1] : vector<8x128xf32> to vector<8xf32>
    %81 = vector.shape_cast %80 : vector<8xf32> to vector<8x1xf32>
    %82 = tpu.reciprocal %81 {approx = true} : vector<8x1xf32> -> vector<8x1xf32>
    %83 = vector.broadcast %82 : vector<8x1xf32> to vector<8x128xf32>
    %84 = arith.mulf %79, %83 : vector<8x128xf32>
    %c0_37 = arith.constant 0 : index
    %c0_38 = arith.constant 0 : index
    %85 = vector.load %arg11[%c0_37, %c0_38] : memref<8x128xf32, #tpu.memory_space<vmem>>, vector<8x128xf32>
    tpu.vector_store %arg11[%c0_37, %c0_38], %84 {strides = array<i32>} : memref<8x128xf32, #tpu.memory_space<vmem>>, vector<8x128xf32>,
    %c0_39 = arith.constant 0 : index
    %c0_40 = arith.constant 0 : index
    %86 = vector.load %arg12[%c0_39, %c0_40] : memref<8x128xf32, #tpu.memory_space<vmem>>, vector<8x128xf32>
    tpu.vector_store %arg12[%c0_39, %c0_40], %43 {strides = array<i32>} : memref<8x128xf32, #tpu.memory_space<vmem>>, vector<8x128xf32>,
    return
  }
}

</mosaic_0001>

<llo_original>
// kernel: _lambda_.1
$region0: #{_lambda_.1}
  #allocation0 [shape = 'u32[]', space=smem, size = 0x4, offset = 0x4, fixed_abs, tag = 'smem constant byte address 0x4 - core index']
  #allocation1 [shape = 'u32[144,128]{1,0:T(1,128)}', space=vmem, size = 0x12000, scoped, tag = 'internal scratch']
  %s0 = inlined_call_operand.vmem [shape: f32[8,128], index: 0, kind: input, shape index: {}]
  %s1 = inlined_call_operand.vmem [shape: f32[8,128], index: 1, kind: input, shape index: {}, may-alias: {1,12}]
  %s2 = inlined_call_operand.vmem [shape: f32[8,8,128], index: 2, kind: input, shape index: {}]
  %s3 = inlined_call_operand.vmem [shape: f32[1,8], index: 3, kind: input, shape index: {}]
  %s4 = inlined_call_operand.hbm [shape: f32[128,384], index: 4, kind: input, shape index: {}]
  %s5 = inlined_call_operand.hbm [shape: f32[128,384], index: 5, kind: input, shape index: {}]
  %s6 = inlined_call_operand.vmem [shape: f32[4,128], index: 6, kind: input, shape index: {}]
  %s7 = inlined_call_operand.hbm [shape: f32[256,128], index: 7, kind: input, shape index: {}]
  %s8 = inlined_call_operand.vmem [shape: f32[1,128], index: 8, kind: input, shape index: {}]
  %s9 = inlined_call_operand.vmem [shape: f32[128,128], index: 9, kind: input, shape index: {}]
  %s10 = inlined_call_operand.vmem [shape: f32[1,128], index: 10, kind: input, shape index: {}]
  %s11 = inlined_call_operand.vmem [shape: f32[8,128], index: 11, kind: output, shape index: {0}]
  %s12 = inlined_call_operand.vmem [shape: f32[8,128], index: 12, kind: output, shape index: {1}, may-alias: {1,12}]
  %13 = xla_tuple %s11, %s12
  %s14 = sld [smem:[#allocation0]]
  $region74: #{_lambda_.1} parent=0
    _
  %s16 = ssub.s32 1, %s14
  %s17 = scalar_select 0, %s16, %s14
  $region1: #{_lambda_.1} parent=0
    #allocation2 [shape = 'u8[196608]{0}', space=vmem, size = 0x30000, scoped, tag = 'input window, operand 4, single buffered']
    #allocation3 [shape = 's32[1]{0}', space=sflag, size = 0x4, scoped, tag = 'scoped memory for _lambda_.1']
    #allocation4 [shape = 'u8[196608]{0}', space=vmem, size = 0x30000, scoped, tag = 'input window, operand 5, single buffered']
    #allocation5 [shape = 's32[1]{0}', space=sflag, size = 0x4, scoped, tag = 'scoped memory for _lambda_.1']
    #allocation6 [shape = 'u8[131072]{0}', space=vmem, size = 0x20000, scoped, tag = 'input window, operand 7, single buffered']
    %18 = vsyncpa [#allocation3], 0
    %19 = vsyncpa [#allocation5], 0
    // Predicated region
    $region2: #{_lambda_.1} parent=1 // pred_check
      _
    $region3: #{_lambda_.1} parent=1 // pred_check_branch
      %21 = sbr.rel (0) target = $region5
    $region4: #{_lambda_.1} parent=1 // pred_region
      _
    $region5: #{_lambda_.1} parent=1 // pred_fallthru
      _
    // Predicated region
    $region6: #{_lambda_.1} parent=1 // pred_check
      _
    $region7: #{_lambda_.1} parent=1 // pred_check_branch
      %23 = sbr.rel (0) target = $region9
    $region8: #{_lambda_.1} parent=1 // pred_region
      _
    $region9: #{_lambda_.1} parent=1 // pred_fallthru
      _
    // Predicated region
    $region10: #{_lambda_.1} parent=1 // pred_check
      _
    $region11: #{_lambda_.1} parent=1 // pred_check_branch
      %25 = sbr.rel (0) target = $region13
    $region12: #{_lambda_.1} parent=1 // pred_region
      _
    $region13: #{_lambda_.1} parent=1 // pred_fallthru
      _
    // Predicated region
    $region14: #{_lambda_.1} parent=1 // pred_check
      _
    $region15: #{_lambda_.1} parent=1 // pred_check_branch
      %27 = sbr.rel (0) target = $region17
    $region16: #{_lambda_.1} parent=1 // pred_region
      _
    $region17: #{_lambda_.1} parent=1 // pred_fallthru
      _
    // Predicated region
    $region18: #{_lambda_.1} parent=1 // pred_check
      _
    $region19: #{_lambda_.1} parent=1 // pred_check_branch
      %29 = sbr.rel (0) target = $region21
    $region20: #{_lambda_.1} parent=1 // pred_region
      %s31 = ssub.s32 6144, 6144
      %32 = vsyncadd [#allocation3], %s31
      %s33 = sshll.u32 [#allocation2], 4
      %s34 = int_to_ptr.vmem [resolvable:$true] %s33
      %39 = dma.hbm_to_vmem [thread:$0]  %s4, 6144, %s34, [#allocation3], 384, 384, 24
    $region21: #{_lambda_.1} parent=1 // pred_fallthru
      _
    // Predicated region
    $region22: #{_lambda_.1} parent=1 // pred_check
      _
    $region23: #{_lambda_.1} parent=1 // pred_check_branch
      %41 = sbr.rel (0) target = $region25
    $region24: #{_lambda_.1} parent=1 // pred_region
      %s43 = ssub.s32 6144, 6144
      %44 = vsyncadd [#allocation5], %s43
      %s45 = sshll.u32 [#allocation4], 4
      %s46 = int_to_ptr.vmem [resolvable:$true] %s45
      %51 = dma.hbm_to_vmem [thread:$0]  %s5, 6144, %s46, [#allocation5], 384, 384, 24
    $region25: #{_lambda_.1} parent=1 // pred_fallthru
      _
    // Predicated region
    $region26: #{_lambda_.1} parent=1 // pred_check
      _
    $region27: #{_lambda_.1} parent=1 // pred_check_branch
      %53 = sbr.rel (0) target = $region29
    $region28: #{_lambda_.1} parent=1 // pred_region
      _
    $region29: #{_lambda_.1} parent=1 // pred_fallthru
      _
    // Predicated region
    $region30: #{_lambda_.1} parent=1 // pred_check
      _
    $region31: #{_lambda_.1} parent=1 // pred_check_branch
      %55 = sbr.rel (0) target = $region33
    $region32: #{_lambda_.1} parent=1 // pred_region
      %s57 = ssub.s32 4096, 4096
      %58 = vsyncadd [#allocation5], %s57
      %s59 = sshll.u32 [#allocation6], 4
      %s60 = int_to_ptr.vmem [resolvable:$true] %s59
      %65 = dma.hbm_to_vmem [thread:$0]  %s7, 4096, %s60, [#allocation5], 128, 128, 8
    $region33: #{_lambda_.1} parent=1 // pred_fallthru
      _
    // Predicated region
    $region34: #{_lambda_.1} parent=1 // pred_check
      _
    $region35: #{_lambda_.1} parent=1 // pred_check_branch
      %67 = sbr.rel (0) target = $region37
    $region36: #{_lambda_.1} parent=1 // pred_region
      _
    $region37: #{_lambda_.1} parent=1 // pred_fallthru
      _
    // Predicated region
    $region38: #{_lambda_.1} parent=1 // pred_check
      _
    $region39: #{_lambda_.1} parent=1 // pred_check_branch
      %69 = sbr.rel (0) target = $region41
    $region40: #{_lambda_.1} parent=1 // pred_region
      _
    $region41: #{_lambda_.1} parent=1 // pred_fallthru
      _
    // Predicated region
    $region42: #{_lambda_.1} parent=1 // pred_check
      _
    $region43: #{_lambda_.1} parent=1 // pred_check_branch
      %71 = sbr.rel (0) target = $region45
    $region44: #{_lambda_.1} parent=1 // pred_region
      _
    $region45: #{_lambda_.1} parent=1 // pred_fallthru
      _
    // Predicated region
    $region46: #{_lambda_.1} parent=1 // pred_check
      _
    $region47: #{_lambda_.1} parent=1 // pred_check_branch
      %73 = sbr.rel (0) target = $region49
    $region48: #{_lambda_.1} parent=1 // pred_region
      %74 = dma.done [#allocation3], 6144
    $region49: #{_lambda_.1} parent=1 // pred_fallthru
      _
    // Predicated region
    $region50: #{_lambda_.1} parent=1 // pred_check
      _
    $region51: #{_lambda_.1} parent=1 // pred_check_branch
      %76 = sbr.rel (0) target = $region53
    $region52: #{_lambda_.1} parent=1 // pred_region
      %77 = dma.done [#allocation5], 6144
    $region53: #{_lambda_.1} parent=1 // pred_fallthru
      _
    // Predicated region
    $region54: #{_lambda_.1} parent=1 // pred_check
      _
    $region55: #{_lambda_.1} parent=1 // pred_check_branch
      %79 = sbr.rel (0) target = $region57
    $region56: #{_lambda_.1} parent=1 // pred_region
      %80 = dma.done [#allocation5], 4096
    $region57: #{_lambda_.1} parent=1 // pred_fallthru
      _
    %v81 = vld [vmem:[%s0] sm:$0xff]
    %v82 = vld [vmem:[%s1] sm:$0xff]
    %v83 = vld [vmem:[#allocation2] sm:$0xff]
    %v84 = vld [vmem:[#allocation2 + $0x8] sm:$0xff]
    %v85 = vld [vmem:[#allocation2 + $0x10] sm:$0xff]
    %v86 = vld [vmem:[#allocation2 + $0x18] sm:$0xff]
    %v87 = vld [vmem:[#allocation2 + $0x20] sm:$0xff]
    %v88 = vld [vmem:[#allocation2 + $0x28] sm:$0xff]
    %v89 = vld [vmem:[#allocation2 + $0x30] sm:$0xff]
    %v90 = vld [vmem:[#allocation2 + $0x38] sm:$0xff]
    %v91 = vld [vmem:[#allocation2 + $0x40] sm:$0xff]
    %v92 = vld [vmem:[#allocation2 + $0x48] sm:$0xff]
    %v93 = vld [vmem:[#allocation2 + $0x50] sm:$0xff]
    %v94 = vld [vmem:[#allocation2 + $0x58] sm:$0xff]
    %v95 = vld [vmem:[#allocation2 + $0x60] sm:$0xff]
    %v96 = vld [vmem:[#allocation2 + $0x68] sm:$0xff]
    %v97 = vld [vmem:[#allocation2 + $0x70] sm:$0xff]
    %v98 = vld [vmem:[#allocation2 + $0x78] sm:$0xff]
    %v99 = vld [vmem:[#allocation2 + $0x80] sm:$0xff]
    %v100 = vld [vmem:[#allocation2 + $0x88] sm:$0xff]
    %v101 = vld [vmem:[#allocation2 + $0x90] sm:$0xff]
    %v102 = vld [vmem:[#allocation2 + $0x98] sm:$0xff]
    %v103 = vld [vmem:[#allocation2 + $0xa0] sm:$0xff]
    %v104 = vld [vmem:[#allocation2 + $0xa8] sm:$0xff]
    %v105 = vld [vmem:[#allocation2 + $0xb0] sm:$0xff]
    %v106 = vld [vmem:[#allocation2 + $0xb8] sm:$0xff]
    %v107 = vld [vmem:[#allocation2 + $0xc0] sm:$0xff]
    %v108 = vld [vmem:[#allocation2 + $0xc8] sm:$0xff]
    %v109 = vld [vmem:[#allocation2 + $0xd0] sm:$0xff]
    %v110 = vld [vmem:[#allocation2 + $0xd8] sm:$0xff]
    %v111 = vld [vmem:[#allocation2 + $0xe0] sm:$0xff]
    %v112 = vld [vmem:[#allocation2 + $0xe8] sm:$0xff]
    %v113 = vld [vmem:[#allocation2 + $0xf0] sm:$0xff]
    %v114 = vld [vmem:[#allocation2 + $0xf8] sm:$0xff]
    %v115 = vld [vmem:[#allocation2 + $0x100] sm:$0xff]
    %v116 = vld [vmem:[#allocation2 + $0x108] sm:$0xff]
    %v117 = vld [vmem:[#allocation2 + $0x110] sm:$0xff]
    %v118 = vld [vmem:[#allocation2 + $0x118] sm:$0xff]
    %v119 = vld [vmem:[#allocation2 + $0x120] sm:$0xff]
    %v120 = vld [vmem:[#allocation2 + $0x128] sm:$0xff]
    %v121 = vld [vmem:[#allocation2 + $0x130] sm:$0xff]
    %v122 = vld [vmem:[#allocation2 + $0x138] sm:$0xff]
    %v123 = vld [vmem:[#allocation2 + $0x140] sm:$0xff]
    %v124 = vld [vmem:[#allocation2 + $0x148] sm:$0xff]
    %v125 = vld [vmem:[#allocation2 + $0x150] sm:$0xff]
    %v126 = vld [vmem:[#allocation2 + $0x158] sm:$0xff]
    %v127 = vld [vmem:[#allocation2 + $0x160] sm:$0xff]
    %v128 = vld [vmem:[#allocation2 + $0x168] sm:$0xff]
    %v129 = vld [vmem:[#allocation2 + $0x170] sm:$0xff]
    %v130 = vld [vmem:[#allocation2 + $0x178] sm:$0xff]
    %131 = vmatprep.subr.mxu0 %v84
    %132 = vmatpush1.msra.mxu0 %v83
    %133 = vmatprep.subr.mxu0 %v87
    %134 = vmatpush1.msra.mxu0 %v86
    %135 = vmatprep.subr.mxu0 %v90
    %136 = vmatpush1.msra.mxu0 %v89
    %137 = vmatprep.subr.mxu0 %v93
    %138 = vmatpush1.msra.mxu0 %v92
    %139 = vmatprep.subr.mxu0 %v96
    %140 = vmatpush1.msra.mxu0 %v95
    %141 = vmatprep.subr.mxu0 %v99
    %142 = vmatpush1.msra.mxu0 %v98
    %143 = vmatprep.subr.mxu0 %v102
    %144 = vmatpush1.msra.mxu0 %v101
    %145 = vmatprep.subr.mxu0 %v105
    %146 = vmatpush1.msra.mxu0 %v104
    %147 = vmatprep.subr.mxu0 %v108
    %148 = vmatpush1.msra.mxu0 %v107
    %149 = vmatprep.subr.mxu0 %v111
    %150 = vmatpush1.msra.mxu0 %v110
    %151 = vmatprep.subr.mxu0 %v114
    %152 = vmatpush1.msra.mxu0 %v113
    %153 = vmatprep.subr.mxu0 %v117
    %154 = vmatpush1.msra.mxu0 %v116
    %155 = vmatprep.subr.mxu0 %v120
    %156 = vmatpush1.msra.mxu0 %v119
    %157 = vmatprep.subr.mxu0 %v123
    %158 = vmatpush1.msra.mxu0 %v122
    %159 = vmatprep.subr.mxu0 %v126
    %160 = vmatpush1.msra.mxu0 %v125
    %161 = vmatprep.subr.mxu0 %v129
    %162 = vmatpush1.msra.mxu0 %v128
    %163 = vmatprep.subr.mxu0 0.0
    %164 = vmatpush1.msra.mxu0 0.0
    %165 = vmatprep.subr.mxu0 0.0
    %166 = vmatpush1.msra.mxu0 0.0
    %167 = vmatprep.subr.mxu0 0.0
    %168 = vmatpush1.msra.mxu0 0.0
    %169 = vmatprep.subr.mxu0 0.0
    %170 = vmatpush1.msra.mxu0 0.0
    %171 = vmatprep.subr.mxu0 0.0
    %172 = vmatpush1.msra.mxu0 0.0
    %173 = vmatprep.subr.mxu0 0.0
    %174 = vmatpush1.msra.mxu0 0.0
    %175 = vmatprep.subr.mxu0 0.0
    %176 = vmatpush1.msra.mxu0 0.0
    %177 = vmatprep.subr.mxu0 0.0
    %178 = vmatpush1.msra.mxu0 0.0
    %179 = vmatprep.subr.mxu0 0.0
    %180 = vmatpush1.msra.mxu0 0.0
    %181 = vmatprep.subr.mxu0 0.0
    %182 = vmatpush1.msra.mxu0 0.0
    %183 = vmatprep.subr.mxu0 0.0
    %184 = vmatpush1.msra.mxu0 0.0
    %185 = vmatprep.subr.mxu0 0.0
    %186 = vmatpush1.msra.mxu0 0.0
    %187 = vmatprep.subr.mxu0 0.0
    %188 = vmatpush1.msra.mxu0 0.0
    %189 = vmatprep.subr.mxu0 0.0
    %190 = vmatpush1.msra.mxu0 0.0
    %191 = vmatprep.subr.mxu0 0.0
    %192 = vmatpush1.msra.mxu0 0.0
    %193 = vmatprep.subr.mxu0 0.0
    %194 = vmatpush1.msra.mxu0 0.0
    %195 = vmatprep.mubr.f32.mxu0 0.0
    %196 = vmatmul.mubr.f32.gmra.mrb[0].mxu0 %v81
    %v197 = vpop.f32.mrb[0].mxu0
    %v198 = vadd.f32 0.0, %v197
    %v199 = vpop.f32.mrb[0].mxu0
    %v200 = vadd.f32 0.0, %v199
    %201 = vdwg.mxu0
    %202 = vmatprep.subr.mxu0 0.0
    %203 = vmatpush1.msra.mxu0 %v85
    %204 = vmatprep.subr.mxu0 0.0
    %205 = vmatpush1.msra.mxu0 %v88
    %206 = vmatprep.subr.mxu0 0.0
    %207 = vmatpush1.msra.mxu0 %v91
    %208 = vmatprep.subr.mxu0 0.0
    %209 = vmatpush1.msra.mxu0 %v94
    %210 = vmatprep.subr.mxu0 0.0
    %211 = vmatpush1.msra.mxu0 %v97
    %212 = vmatprep.subr.mxu0 0.0
    %213 = vmatpush1.msra.mxu0 %v100
    %214 = vmatprep.subr.mxu0 0.0
    %215 = vmatpush1.msra.mxu0 %v103
    %216 = vmatprep.subr.mxu0 0.0
    %217 = vmatpush1.msra.mxu0 %v106
    %218 = vmatprep.subr.mxu0 0.0
    %219 = vmatpush1.msra.mxu0 %v109
    %220 = vmatprep.subr.mxu0 0.0
    %221 = vmatpush1.msra.mxu0 %v112
    %222 = vmatprep.subr.mxu0 0.0
    %223 = vmatpush1.msra.mxu0 %v115
    %224 = vmatprep.subr.mxu0 0.0
    %225 = vmatpush1.msra.mxu0 %v118
    %226 = vmatprep.subr.mxu0 0.0
    %227 = vmatpush1.msra.mxu0 %v121
    %228 = vmatprep.subr.mxu0 0.0
    %229 = vmatpush1.msra.mxu0 %v124
    %230 = vmatprep.subr.mxu0 0.0
    %231 = vmatpush1.msra.mxu0 %v127
    %232 = vmatprep.subr.mxu0 0.0
    %233 = vmatpush1.msra.mxu0 %v130
    %234 = vmatprep.subr.mxu0 0.0
    %235 = vmatpush1.msra.mxu0 0.0
    %236 = vmatprep.subr.mxu0 0.0
    %237 = vmatpush1.msra.mxu0 0.0
    %238 = vmatprep.subr.mxu0 0.0
    %239 = vmatpush1.msra.mxu0 0.0
    %240 = vmatprep.subr.mxu0 0.0
    %241 = vmatpush1.msra.mxu0 0.0
    %242 = vmatprep.subr.mxu0 0.0
    %243 = vmatpush1.msra.mxu0 0.0
    %244 = vmatprep.subr.mxu0 0.0
    %245 = vmatpush1.msra.mxu0 0.0
    %246 = vmatprep.subr.mxu0 0.0
    %247 = vmatpush1.msra.mxu0 0.0
    %248 = vmatprep.subr.mxu0 0.0
    %249 = vmatpush1.msra.mxu0 0.0
    %250 = vmatprep.subr.mxu0 0.0
    %251 = vmatpush1.msra.mxu0 0.0
    %252 = vmatprep.subr.mxu0 0.0
    %253 = vmatpush1.msra.mxu0 0.0
    %254 = vmatprep.subr.mxu0 0.0
    %255 = vmatpush1.msra.mxu0 0.0
    %256 = vmatprep.subr.mxu0 0.0
    %257 = vmatpush1.msra.mxu0 0.0
    %258 = vmatprep.subr.mxu0 0.0
    %259 = vmatpush1.msra.mxu0 0.0
    %260 = vmatprep.subr.mxu0 0.0
    %261 = vmatpush1.msra.mxu0 0.0
    %262 = vmatprep.subr.mxu0 0.0
    %263 = vmatpush1.msra.mxu0 0.0
    %264 = vmatprep.subr.mxu0 0.0
    %265 = vmatpush1.msra.mxu0 0.0
    %266 = vmatprep.mubr.f32.mxu0 0.0
    %267 = vmatmul.mubr.f32.gmra.mrb[0].mxu0 %v81
    %v268 = vpop.f32.mrb[0].mxu0
    %v269 = vadd.f32 0.0, %v268
    %v270 = vpop.f32.mrb[0].mxu0
    %271 = vdwg.mxu0
    %v272 = vld [vmem:[#allocation4] sm:$0xff]
    %v273 = vld [vmem:[#allocation4 + $0x8] sm:$0xff]
    %v274 = vld [vmem:[#allocation4 + $0x10] sm:$0xff]
    %v275 = vld [vmem:[#allocation4 + $0x18] sm:$0xff]
    %v276 = vld [vmem:[#allocation4 + $0x20] sm:$0xff]
    %v277 = vld [vmem:[#allocation4 + $0x28] sm:$0xff]
    %v278 = vld [vmem:[#allocation4 + $0x30] sm:$0xff]
    %v279 = vld [vmem:[#allocation4 + $0x38] sm:$0xff]
    %v280 = vld [vmem:[#allocation4 + $0x40] sm:$0xff]
    %v281 = vld [vmem:[#allocation4 + $0x48] sm:$0xff]
    %v282 = vld [vmem:[#allocation4 + $0x50] sm:$0xff]
    %v283 = vld [vmem:[#allocation4 + $0x58] sm:$0xff]
    %v284 = vld [vmem:[#allocation4 + $0x60] sm:$0xff]
    %v285 = vld [vmem:[#allocation4 + $0x68] sm:$0xff]
    %v286 = vld [vmem:[#allocation4 + $0x70] sm:$0xff]
    %v287 = vld [vmem:[#allocation4 + $0x78] sm:$0xff]
    %v288 = vld [vmem:[#allocation4 + $0x80] sm:$0xff]
    %v289 = vld [vmem:[#allocation4 + $0x88] sm:$0xff]
    %v290 = vld [vmem:[#allocation4 + $0x90] sm:$0xff]
    %v291 = vld [vmem:[#allocation4 + $0x98] sm:$0xff]
    %v292 = vld [vmem:[#allocation4 + $0xa0] sm:$0xff]
    %v293 = vld [vmem:[#allocation4 + $0xa8] sm:$0xff]
    %v294 = vld [vmem:[#allocation4 + $0xb0] sm:$0xff]
    %v295 = vld [vmem:[#allocation4 + $0xb8] sm:$0xff]
    %v296 = vld [vmem:[#allocation4 + $0xc0] sm:$0xff]
    %v297 = vld [vmem:[#allocation4 + $0xc8] sm:$0xff]
    %v298 = vld [vmem:[#allocation4 + $0xd0] sm:$0xff]
    %v299 = vld [vmem:[#allocation4 + $0xd8] sm:$0xff]
    %v300 = vld [vmem:[#allocation4 + $0xe0] sm:$0xff]
    %v301 = vld [vmem:[#allocation4 + $0xe8] sm:$0xff]
    %v302 = vld [vmem:[#allocation4 + $0xf0] sm:$0xff]
    %v303 = vld [vmem:[#allocation4 + $0xf8] sm:$0xff]
    %v304 = vld [vmem:[#allocation4 + $0x100] sm:$0xff]
    %v305 = vld [vmem:[#allocation4 + $0x108] sm:$0xff]
    %v306 = vld [vmem:[#allocation4 + $0x110] sm:$0xff]
    %v307 = vld [vmem:[#allocation4 + $0x118] sm:$0xff]
    %v308 = vld [vmem:[#allocation4 + $0x120] sm:$0xff]
    %v309 = vld [vmem:[#allocation4 + $0x128] sm:$0xff]
    %v310 = vld [vmem:[#allocation4 + $0x130] sm:$0xff]
    %v311 = vld [vmem:[#allocation4 + $0x138] sm:$0xff]
    %v312 = vld [vmem:[#allocation4 + $0x140] sm:$0xff]
    %v313 = vld [vmem:[#allocation4 + $0x148] sm:$0xff]
    %v314 = vld [vmem:[#allocation4 + $0x150] sm:$0xff]
    %v315 = vld [vmem:[#allocation4 + $0x158] sm:$0xff]
    %v316 = vld [vmem:[#allocation4 + $0x160] sm:$0xff]
    %v317 = vld [vmem:[#allocation4 + $0x168] sm:$0xff]
    %v318 = vld [vmem:[#allocation4 + $0x170] sm:$0xff]
    %v319 = vld [vmem:[#allocation4 + $0x178] sm:$0xff]
    %320 = vmatprep.subr.mxu0 %v273
    %321 = vmatpush1.msra.mxu0 %v272
    %322 = vmatprep.subr.mxu0 %v276
    %323 = vmatpush1.msra.mxu0 %v275
    %324 = vmatprep.subr.mxu0 %v279
    %325 = vmatpush1.msra.mxu0 %v278
    %326 = vmatprep.subr.mxu0 %v282
    %327 = vmatpush1.msra.mxu0 %v281
    %328 = vmatprep.subr.mxu0 %v285
    %329 = vmatpush1.msra.mxu0 %v284
    %330 = vmatprep.subr.mxu0 %v288
    %331 = vmatpush1.msra.mxu0 %v287
    %332 = vmatprep.subr.mxu0 %v291
    %333 = vmatpush1.msra.mxu0 %v290
    %334 = vmatprep.subr.mxu0 %v294
    %335 = vmatpush1.msra.mxu0 %v293
    %336 = vmatprep.subr.mxu0 %v297
    %337 = vmatpush1.msra.mxu0 %v296
    %338 = vmatprep.subr.mxu0 %v300
    %339 = vmatpush1.msra.mxu0 %v299
    %340 = vmatprep.subr.mxu0 %v303
    %341 = vmatpush1.msra.mxu0 %v302
    %342 = vmatprep.subr.mxu0 %v306
    %343 = vmatpush1.msra.mxu0 %v305
    %344 = vmatprep.subr.mxu0 %v309
    %345 = vmatpush1.msra.mxu0 %v308
    %346 = vmatprep.subr.mxu0 %v312
    %347 = vmatpush1.msra.mxu0 %v311
    %348 = vmatprep.subr.mxu0 %v315
    %349 = vmatpush1.msra.mxu0 %v314
    %350 = vmatprep.subr.mxu0 %v318
    %351 = vmatpush1.msra.mxu0 %v317
    %352 = vmatprep.subr.mxu0 0.0
    %353 = vmatpush1.msra.mxu0 0.0
    %354 = vmatprep.subr.mxu0 0.0
    %355 = vmatpush1.msra.mxu0 0.0
    %356 = vmatprep.subr.mxu0 0.0
    %357 = vmatpush1.msra.mxu0 0.0
    %358 = vmatprep.subr.mxu0 0.0
    %359 = vmatpush1.msra.mxu0 0.0
    %360 = vmatprep.subr.mxu0 0.0
    %361 = vmatpush1.msra.mxu0 0.0
    %362 = vmatprep.subr.mxu0 0.0
    %363 = vmatpush1.msra.mxu0 0.0
    %364 = vmatprep.subr.mxu0 0.0
    %365 = vmatpush1.msra.mxu0 0.0
    %366 = vmatprep.subr.mxu0 0.0
    %367 = vmatpush1.msra.mxu0 0.0
    %368 = vmatprep.subr.mxu0 0.0
    %369 = vmatpush1.msra.mxu0 0.0
    %370 = vmatprep.subr.mxu0 0.0
    %371 = vmatpush1.msra.mxu0 0.0
    %372 = vmatprep.subr.mxu0 0.0
    %373 = vmatpush1.msra.mxu0 0.0
    %374 = vmatprep.subr.mxu0 0.0
    %375 = vmatpush1.msra.mxu0 0.0
    %376 = vmatprep.subr.mxu0 0.0
    %377 = vmatpush1.msra.mxu0 0.0
    %378 = vmatprep.subr.mxu0 0.0
    %379 = vmatpush1.msra.mxu0 0.0
    %380 = vmatprep.subr.mxu0 0.0
    %381 = vmatpush1.msra.mxu0 0.0
    %382 = vmatprep.subr.mxu0 0.0
    %383 = vmatpush1.msra.mxu0 0.0
    %384 = vmatprep.mubr.f32.mxu0 0.0
    %385 = vmatmul.mubr.f32.gmra.mrb[0].mxu0 %v82
    %v386 = vpop.f32.mrb[0].mxu0
    %v387 = vadd.f32 0.0, %v386
    %v388 = vpop.f32.mrb[0].mxu0
    %v389 = vadd.f32 0.0, %v388
    %390 = vdwg.mxu0
    %391 = vmatprep.subr.mxu0 0.0
    %392 = vmatpush1.msra.mxu0 %v274
    %393 = vmatprep.subr.mxu0 0.0
    %394 = vmatpush1.msra.mxu0 %v277
    %395 = vmatprep.subr.mxu0 0.0
    %396 = vmatpush1.msra.mxu0 %v280
    %397 = vmatprep.subr.mxu0 0.0
    %398 = vmatpush1.msra.mxu0 %v283
    %399 = vmatprep.subr.mxu0 0.0
    %400 = vmatpush1.msra.mxu0 %v286
    %401 = vmatprep.subr.mxu0 0.0
    %402 = vmatpush1.msra.mxu0 %v289
    %403 = vmatprep.subr.mxu0 0.0
    %404 = vmatpush1.msra.mxu0 %v292
    %405 = vmatprep.subr.mxu0 0.0
    %406 = vmatpush1.msra.mxu0 %v295
    %407 = vmatprep.subr.mxu0 0.0
    %408 = vmatpush1.msra.mxu0 %v298
    %409 = vmatprep.subr.mxu0 0.0
    %410 = vmatpush1.msra.mxu0 %v301
    %411 = vmatprep.subr.mxu0 0.0
    %412 = vmatpush1.msra.mxu0 %v304
    %413 = vmatprep.subr.mxu0 0.0
    %414 = vmatpush1.msra.mxu0 %v307
    %415 = vmatprep.subr.mxu0 0.0
    %416 = vmatpush1.msra.mxu0 %v310
    %417 = vmatprep.subr.mxu0 0.0
    %418 = vmatpush1.msra.mxu0 %v313
    %419 = vmatprep.subr.mxu0 0.0
    %420 = vmatpush1.msra.mxu0 %v316
    %421 = vmatprep.subr.mxu0 0.0
    %422 = vmatpush1.msra.mxu0 %v319
    %423 = vmatprep.subr.mxu0 0.0
    %424 = vmatpush1.msra.mxu0 0.0
    %425 = vmatprep.subr.mxu0 0.0
    %426 = vmatpush1.msra.mxu0 0.0
    %427 = vmatprep.subr.mxu0 0.0
    %428 = vmatpush1.msra.mxu0 0.0
    %429 = vmatprep.subr.mxu0 0.0
    %430 = vmatpush1.msra.mxu0 0.0
    %431 = vmatprep.subr.mxu0 0.0
    %432 = vmatpush1.msra.mxu0 0.0
    %433 = vmatprep.subr.mxu0 0.0
    %434 = vmatpush1.msra.mxu0 0.0
    %435 = vmatprep.subr.mxu0 0.0
    %436 = vmatpush1.msra.mxu0 0.0
    %437 = vmatprep.subr.mxu0 0.0
    %438 = vmatpush1.msra.mxu0 0.0
    %439 = vmatprep.subr.mxu0 0.0
    %440 = vmatpush1.msra.mxu0 0.0
    %441 = vmatprep.subr.mxu0 0.0
    %442 = vmatpush1.msra.mxu0 0.0
    %443 = vmatprep.subr.mxu0 0.0
    %444 = vmatpush1.msra.mxu0 0.0
    %445 = vmatprep.subr.mxu0 0.0
    %446 = vmatpush1.msra.mxu0 0.0
    %447 = vmatprep.subr.mxu0 0.0
    %448 = vmatpush1.msra.mxu0 0.0
    %449 = vmatprep.subr.mxu0 0.0
    %450 = vmatpush1.msra.mxu0 0.0
    %451 = vmatprep.subr.mxu0 0.0
    %452 = vmatpush1.msra.mxu0 0.0
    %453 = vmatprep.subr.mxu0 0.0
    %454 = vmatpush1.msra.mxu0 0.0
    %455 = vmatprep.mubr.f32.mxu0 0.0
    %456 = vmatmul.mubr.f32.gmra.mrb[0].mxu0 %v82
    %v457 = vpop.f32.mrb[0].mxu0
    %v458 = vadd.f32 0.0, %v457
    %v459 = vpop.f32.mrb[0].mxu0
    %460 = vdwg.mxu0
    %v461 = vadd.f32 %v198, %v387
    %v462 = vld [vmem:[%s6] sm:$0x1]
    %v463 = vlaneseq
    %v464 = vshrl.u32 %v463, 7
    %v465 = vsub.s32 0, %v464
    %v466 = vrot.slane %v462, %v465
    %v467 = vadd.f32 %v461, %v466
    %v468 = vxor.u32 %v467, 2147483648
    %v469 = vmul.f32 %v468, 1.442695
    %v470 = vpow.pop %v469
    %v471 = vadd.f32 %v470, 1.0
    %v472 = vrcp.pop %v471
    %v473 = vmul.f32 1.0, %v472
    %v474 = vadd.f32 %v200, %v389
    %v475 = vld [vmem:[%s6 + $0x1] sm:$0x1]
    %v476 = vlaneseq
    %v477 = vshrl.u32 %v476, 7
    %v478 = vsub.s32 0, %v477
    %v479 = vrot.slane %v475, %v478
    %v480 = vadd.f32 %v474, %v479
    %v481 = vxor.u32 %v480, 2147483648
    %v482 = vmul.f32 %v481, 1.442695
    %v483 = vpow.pop %v482
    %v484 = vadd.f32 %v483, 1.0
    %v485 = vrcp.pop %v484
    %v486 = vmul.f32 1.0, %v485
    %v487 = vld [vmem:[%s6 + $0x2] sm:$0x1]
    %v488 = vlaneseq
    %v489 = vshrl.u32 %v488, 7
    %v490 = vsub.s32 0, %v489
    %v491 = vrot.slane %v487, %v490
    %v492 = vadd.f32 %v269, %v491
    %v493 = vld [vmem:[%s6 + $0x3] sm:$0x1]
    %v494 = vlaneseq
    %v495 = vshrl.u32 %v494, 7
    %v496 = vsub.s32 0, %v495
    %v497 = vrot.slane %v493, %v496
    %v498 = vadd.f32 %v458, %v497
    %v499 = vmul.f32 %v473, %v498
    %v500 = vadd.f32 %v492, %v499
    %v501 = vtanh.pop %v500
    %v502 = vsub.f32 1.0, %v486
    %v503 = vmul.f32 %v502, %v501
    %v504 = vmul.f32 %v486, %v82
    %v505 = vadd.f32 %v503, %v504
    %v506 = vld [vmem:[%s2] sm:$0xff]
    %v507 = vld [vmem:[%s2 + $0x8] sm:$0xff]
    %v508 = vld [vmem:[%s2 + $0x10] sm:$0xff]
    %v509 = vld [vmem:[%s2 + $0x18] sm:$0xff]
    %v510 = vld [vmem:[%s2 + $0x20] sm:$0xff]
    %v511 = vld [vmem:[%s2 + $0x28] sm:$0xff]
    %v512 = vld [vmem:[%s2 + $0x30] sm:$0xff]
    %v513 = vld [vmem:[%s2 + $0x38] sm:$0xff]
    %v515 = vcombine.high %v505, %v505
    %v517 = vunpack.c.l.s4 1966171168
    %v518 = vunpack.c.0.s8 %v517
    %v519 = vlaneseq
    %v520 = vshrl.u32 %v519, 7
    %v521 = vsub.s32 %v518, %v520
    %v522 = vrot.slane %v505, %v521
    %v524 = vunpack.c.l.s4 1966171168
    %v525 = vunpack.c.0.s8 %v524
    %v526 = vlaneseq
    %v527 = vshrl.u32 %v526, 7
    %v528 = vsub.s32 %v525, %v527
    %v529 = vrot.slane %v515, %v528
    %v530 = vcombine.high %v522, %v522
    %v531 = vcombine.high %v529, %v529
    %v533 = vunpack.c.l.s4 1966171168
    %v534 = vunpack.c.0.s8 %v533
    %v535 = vlaneseq
    %v536 = vshrl.u32 %v535, 7
    %v537 = vsub.s32 %v534, %v536
    %v538 = vrot.slane %v522, %v537
    %v540 = vunpack.c.l.s4 1966171168
    %v541 = vunpack.c.0.s8 %v540
    %v542 = vlaneseq
    %v543 = vshrl.u32 %v542, 7
    %v544 = vsub.s32 %v541, %v543
    %v545 = vrot.slane %v529, %v544
    %v547 = vunpack.c.l.s4 1966171168
    %v548 = vunpack.c.0.s8 %v547
    %v549 = vlaneseq
    %v550 = vshrl.u32 %v549, 7
    %v551 = vsub.s32 %v548, %v550
    %v552 = vrot.slane %v530, %v551
    %v554 = vunpack.c.l.s4 1966171168
    %v555 = vunpack.c.0.s8 %v554
    %v556 = vlaneseq
    %v557 = vshrl.u32 %v556, 7
    %v558 = vsub.s32 %v555, %v557
    %v559 = vrot.slane %v531, %v558
    %v560 = vcombine.high %v538, %v538
    %v561 = vcombine.high %v545, %v545
    %v562 = vcombine.high %v552, %v552
    %v563 = vcombine.high %v559, %v559
    %v572 = vld [vmem:[%s3] sm:$0x1]
    %573 = vmatprep.subr.mxu0 0.0
    %574 = vmatpush1.xpose.msra.mxu0 %v506
    %575 = vmatprep.subr.mxu0 0.0
    %576 = vmatpush1.xpose.msra.mxu0 0.0
    %577 = vmatprep.subr.mxu0 0.0
    %578 = vmatpush1.xpose.msra.mxu0 0.0
    %579 = vmatprep.subr.mxu0 0.0
    %580 = vmatpush1.xpose.msra.mxu0 0.0
    %581 = vmatprep.subr.mxu0 0.0
    %582 = vmatpush1.xpose.msra.mxu0 0.0
    %583 = vmatprep.subr.mxu0 0.0
    %584 = vmatpush1.xpose.msra.mxu0 0.0
    %585 = vmatprep.subr.mxu0 0.0
    %586 = vmatpush1.xpose.msra.mxu0 0.0
    %587 = vmatprep.subr.mxu0 0.0
    %588 = vmatpush1.xpose.msra.mxu0 0.0
    %589 = vmatprep.subr.mxu0 0.0
    %590 = vmatpush1.xpose.msra.mxu0 0.0
    %591 = vmatprep.subr.mxu0 0.0
    %592 = vmatpush1.xpose.msra.mxu0 0.0
    %593 = vmatprep.subr.mxu0 0.0
    %594 = vmatpush1.xpose.msra.mxu0 0.0
    %595 = vmatprep.subr.mxu0 0.0
    %596 = vmatpush1.xpose.msra.mxu0 0.0
    %597 = vmatprep.subr.mxu0 0.0
    %598 = vmatpush1.xpose.msra.mxu0 0.0
    %599 = vmatprep.subr.mxu0 0.0
    %600 = vmatpush1.xpose.msra.mxu0 0.0
    %601 = vmatprep.subr.mxu0 0.0
    %602 = vmatpush1.xpose.msra.mxu0 0.0
    %603 = vmatprep.subr.mxu0 0.0
    %604 = vmatpush1.xpose.msra.mxu0 0.0
    %605 = vmatprep.subr.mxu0 0.0
    %606 = vmatpush1.xpose.msra.mxu0 0.0
    %607 = vmatprep.subr.mxu0 0.0
    %608 = vmatpush1.xpose.msra.mxu0 0.0
    %609 = vmatprep.subr.mxu0 0.0
    %610 = vmatpush1.xpose.msra.mxu0 0.0
    %611 = vmatprep.subr.mxu0 0.0
    %612 = vmatpush1.xpose.msra.mxu0 0.0
    %613 = vmatprep.subr.mxu0 0.0
    %614 = vmatpush1.xpose.msra.mxu0 0.0
    %615 = vmatprep.subr.mxu0 0.0
    %616 = vmatpush1.xpose.msra.mxu0 0.0
    %617 = vmatprep.subr.mxu0 0.0
    %618 = vmatpush1.xpose.msra.mxu0 0.0
    %619 = vmatprep.subr.mxu0 0.0
    %620 = vmatpush1.xpose.msra.mxu0 0.0
    %621 = vmatprep.subr.mxu0 0.0
    %622 = vmatpush1.xpose.msra.mxu0 0.0
    %623 = vmatprep.subr.mxu0 0.0
    %624 = vmatpush1.xpose.msra.mxu0 0.0
    %625 = vmatprep.subr.mxu0 0.0
    %626 = vmatpush1.xpose.msra.mxu0 0.0
    %627 = vmatprep.subr.mxu0 0.0
    %628 = vmatpush1.xpose.msra.mxu0 0.0
    %629 = vmatprep.subr.mxu0 0.0
    %630 = vmatpush1.xpose.msra.mxu0 0.0
    %631 = vmatprep.subr.mxu0 0.0
    %632 = vmatpush1.xpose.msra.mxu0 0.0
    %633 = vmatprep.subr.mxu0 0.0
    %634 = vmatpush1.xpose.msra.mxu0 0.0
    %635 = vmatprep.subr.mxu0 0.0
    %636 = vmatpush1.xpose.msra.mxu0 0.0
    %637 = vmatprep.mubr.f32.mxu0 0.0
    %638 = vmatmul.mubr.f32.gmra.mrb[0].mxu0 %v538
    %v639 = vpop.f32.mrb[0].mxu0
    %v640 = vadd.f32 %v572, %v639
    %v641 = vpop.f32.mrb[0].mxu0
    %642 = vdwg.mxu0
    %643 = vmatprep.subr.mxu0 0.0
    %644 = vmatpush1.xpose.msra.mxu0 %v507
    %645 = vmatprep.subr.mxu0 0.0
    %646 = vmatpush1.xpose.msra.mxu0 0.0
    %647 = vmatprep.subr.mxu0 0.0
    %648 = vmatpush1.xpose.msra.mxu0 0.0
    %649 = vmatprep.subr.mxu0 0.0
    %650 = vmatpush1.xpose.msra.mxu0 0.0
    %651 = vmatprep.subr.mxu0 0.0
    %652 = vmatpush1.xpose.msra.mxu0 0.0
    %653 = vmatprep.subr.mxu0 0.0
    %654 = vmatpush1.xpose.msra.mxu0 0.0
    %655 = vmatprep.subr.mxu0 0.0
    %656 = vmatpush1.xpose.msra.mxu0 0.0
    %657 = vmatprep.subr.mxu0 0.0
    %658 = vmatpush1.xpose.msra.mxu0 0.0
    %659 = vmatprep.subr.mxu0 0.0
    %660 = vmatpush1.xpose.msra.mxu0 0.0
    %661 = vmatprep.subr.mxu0 0.0
    %662 = vmatpush1.xpose.msra.mxu0 0.0
    %663 = vmatprep.subr.mxu0 0.0
    %664 = vmatpush1.xpose.msra.mxu0 0.0
    %665 = vmatprep.subr.mxu0 0.0
    %666 = vmatpush1.xpose.msra.mxu0 0.0
    %667 = vmatprep.subr.mxu0 0.0
    %668 = vmatpush1.xpose.msra.mxu0 0.0
    %669 = vmatprep.subr.mxu0 0.0
    %670 = vmatpush1.xpose.msra.mxu0 0.0
    %671 = vmatprep.subr.mxu0 0.0
    %672 = vmatpush1.xpose.msra.mxu0 0.0
    %673 = vmatprep.subr.mxu0 0.0
    %674 = vmatpush1.xpose.msra.mxu0 0.0
    %675 = vmatprep.subr.mxu0 0.0
    %676 = vmatpush1.xpose.msra.mxu0 0.0
    %677 = vmatprep.subr.mxu0 0.0
    %678 = vmatpush1.xpose.msra.mxu0 0.0
    %679 = vmatprep.subr.mxu0 0.0
    %680 = vmatpush1.xpose.msra.mxu0 0.0
    %681 = vmatprep.subr.mxu0 0.0
    %682 = vmatpush1.xpose.msra.mxu0 0.0
    %683 = vmatprep.subr.mxu0 0.0
    %684 = vmatpush1.xpose.msra.mxu0 0.0
    %685 = vmatprep.subr.mxu0 0.0
    %686 = vmatpush1.xpose.msra.mxu0 0.0
    %687 = vmatprep.subr.mxu0 0.0
    %688 = vmatpush1.xpose.msra.mxu0 0.0
    %689 = vmatprep.subr.mxu0 0.0
    %690 = vmatpush1.xpose.msra.mxu0 0.0
    %691 = vmatprep.subr.mxu0 0.0
    %692 = vmatpush1.xpose.msra.mxu0 0.0
    %693 = vmatprep.subr.mxu0 0.0
    %694 = vmatpush1.xpose.msra.mxu0 0.0
    %695 = vmatprep.subr.mxu0 0.0
    %696 = vmatpush1.xpose.msra.mxu0 0.0
    %697 = vmatprep.subr.mxu0 0.0
    %698 = vmatpush1.xpose.msra.mxu0 0.0
    %699 = vmatprep.subr.mxu0 0.0
    %700 = vmatpush1.xpose.msra.mxu0 0.0
    %701 = vmatprep.subr.mxu0 0.0
    %702 = vmatpush1.xpose.msra.mxu0 0.0
    %703 = vmatprep.subr.mxu0 0.0
    %704 = vmatpush1.xpose.msra.mxu0 0.0
    %705 = vmatprep.subr.mxu0 0.0
    %706 = vmatpush1.xpose.msra.mxu0 0.0
    %707 = vmatprep.mubr.f32.mxu0 0.0
    %708 = vmatmul.mubr.f32.gmra.mrb[0].mxu0 %v552
    %v709 = vpop.f32.mrb[0].mxu0
    %v710 = vadd.f32 %v572, %v709
    %v711 = vpop.f32.mrb[0].mxu0
    %712 = vdwg.mxu0
    %713 = vmatprep.subr.mxu0 0.0
    %714 = vmatpush1.xpose.msra.mxu0 %v508
    %715 = vmatprep.subr.mxu0 0.0
    %716 = vmatpush1.xpose.msra.mxu0 0.0
    %717 = vmatprep.subr.mxu0 0.0
    %718 = vmatpush1.xpose.msra.mxu0 0.0
    %719 = vmatprep.subr.mxu0 0.0
    %720 = vmatpush1.xpose.msra.mxu0 0.0
    %721 = vmatprep.subr.mxu0 0.0
    %722 = vmatpush1.xpose.msra.mxu0 0.0
    %723 = vmatprep.subr.mxu0 0.0
    %724 = vmatpush1.xpose.msra.mxu0 0.0
    %725 = vmatprep.subr.mxu0 0.0
    %726 = vmatpush1.xpose.msra.mxu0 0.0
    %727 = vmatprep.subr.mxu0 0.0
    %728 = vmatpush1.xpose.msra.mxu0 0.0
    %729 = vmatprep.subr.mxu0 0.0
    %730 = vmatpush1.xpose.msra.mxu0 0.0
    %731 = vmatprep.subr.mxu0 0.0
    %732 = vmatpush1.xpose.msra.mxu0 0.0
    %733 = vmatprep.subr.mxu0 0.0
    %734 = vmatpush1.xpose.msra.mxu0 0.0
    %735 = vmatprep.subr.mxu0 0.0
    %736 = vmatpush1.xpose.msra.mxu0 0.0
    %737 = vmatprep.subr.mxu0 0.0
    %738 = vmatpush1.xpose.msra.mxu0 0.0
    %739 = vmatprep.subr.mxu0 0.0
    %740 = vmatpush1.xpose.msra.mxu0 0.0
    %741 = vmatprep.subr.mxu0 0.0
    %742 = vmatpush1.xpose.msra.mxu0 0.0
    %743 = vmatprep.subr.mxu0 0.0
    %744 = vmatpush1.xpose.msra.mxu0 0.0
    %745 = vmatprep.subr.mxu0 0.0
    %746 = vmatpush1.xpose.msra.mxu0 0.0
    %747 = vmatprep.subr.mxu0 0.0
    %748 = vmatpush1.xpose.msra.mxu0 0.0
    %749 = vmatprep.subr.mxu0 0.0
    %750 = vmatpush1.xpose.msra.mxu0 0.0
    %751 = vmatprep.subr.mxu0 0.0
    %752 = vmatpush1.xpose.msra.mxu0 0.0
    %753 = vmatprep.subr.mxu0 0.0
    %754 = vmatpush1.xpose.msra.mxu0 0.0
    %755 = vmatprep.subr.mxu0 0.0
    %756 = vmatpush1.xpose.msra.mxu0 0.0
    %757 = vmatprep.subr.mxu0 0.0
    %758 = vmatpush1.xpose.msra.mxu0 0.0
    %759 = vmatprep.subr.mxu0 0.0
    %760 = vmatpush1.xpose.msra.mxu0 0.0
    %761 = vmatprep.subr.mxu0 0.0
    %762 = vmatpush1.xpose.msra.mxu0 0.0
    %763 = vmatprep.subr.mxu0 0.0
    %764 = vmatpush1.xpose.msra.mxu0 0.0
    %765 = vmatprep.subr.mxu0 0.0
    %766 = vmatpush1.xpose.msra.mxu0 0.0
    %767 = vmatprep.subr.mxu0 0.0
    %768 = vmatpush1.xpose.msra.mxu0 0.0
    %769 = vmatprep.subr.mxu0 0.0
    %770 = vmatpush1.xpose.msra.mxu0 0.0
    %771 = vmatprep.subr.mxu0 0.0
    %772 = vmatpush1.xpose.msra.mxu0 0.0
    %773 = vmatprep.subr.mxu0 0.0
    %774 = vmatpush1.xpose.msra.mxu0 0.0
    %775 = vmatprep.subr.mxu0 0.0
    %776 = vmatpush1.xpose.msra.mxu0 0.0
    %777 = vmatprep.mubr.f32.mxu0 0.0
    %778 = vmatmul.mubr.f32.gmra.mrb[0].mxu0 %v560
    %v779 = vpop.f32.mrb[0].mxu0
    %v780 = vadd.f32 %v572, %v779
    %v781 = vpop.f32.mrb[0].mxu0
    %782 = vdwg.mxu0
    %783 = vmatprep.subr.mxu0 0.0
    %784 = vmatpush1.xpose.msra.mxu0 %v509
    %785 = vmatprep.subr.mxu0 0.0
    %786 = vmatpush1.xpose.msra.mxu0 0.0
    %787 = vmatprep.subr.mxu0 0.0
    %788 = vmatpush1.xpose.msra.mxu0 0.0
    %789 = vmatprep.subr.mxu0 0.0
    %790 = vmatpush1.xpose.msra.mxu0 0.0
    %791 = vmatprep.subr.mxu0 0.0
    %792 = vmatpush1.xpose.msra.mxu0 0.0
    %793 = vmatprep.subr.mxu0 0.0
    %794 = vmatpush1.xpose.msra.mxu0 0.0
    %795 = vmatprep.subr.mxu0 0.0
    %796 = vmatpush1.xpose.msra.mxu0 0.0
    %797 = vmatprep.subr.mxu0 0.0
    %798 = vmatpush1.xpose.msra.mxu0 0.0
    %799 = vmatprep.subr.mxu0 0.0
    %800 = vmatpush1.xpose.msra.mxu0 0.0
    %801 = vmatprep.subr.mxu0 0.0
    %802 = vmatpush1.xpose.msra.mxu0 0.0
    %803 = vmatprep.subr.mxu0 0.0
    %804 = vmatpush1.xpose.msra.mxu0 0.0
    %805 = vmatprep.subr.mxu0 0.0
    %806 = vmatpush1.xpose.msra.mxu0 0.0
    %807 = vmatprep.subr.mxu0 0.0
    %808 = vmatpush1.xpose.msra.mxu0 0.0
    %809 = vmatprep.subr.mxu0 0.0
    %810 = vmatpush1.xpose.msra.mxu0 0.0
    %811 = vmatprep.subr.mxu0 0.0
    %812 = vmatpush1.xpose.msra.mxu0 0.0
    %813 = vmatprep.subr.mxu0 0.0
    %814 = vmatpush1.xpose.msra.mxu0 0.0
    %815 = vmatprep.subr.mxu0 0.0
    %816 = vmatpush1.xpose.msra.mxu0 0.0
    %817 = vmatprep.subr.mxu0 0.0
    %818 = vmatpush1.xpose.msra.mxu0 0.0
    %819 = vmatprep.subr.mxu0 0.0
    %820 = vmatpush1.xpose.msra.mxu0 0.0
    %821 = vmatprep.subr.mxu0 0.0
    %822 = vmatpush1.xpose.msra.mxu0 0.0
    %823 = vmatprep.subr.mxu0 0.0
    %824 = vmatpush1.xpose.msra.mxu0 0.0
    %825 = vmatprep.subr.mxu0 0.0
    %826 = vmatpush1.xpose.msra.mxu0 0.0
    %827 = vmatprep.subr.mxu0 0.0
    %828 = vmatpush1.xpose.msra.mxu0 0.0
    %829 = vmatprep.subr.mxu0 0.0
    %830 = vmatpush1.xpose.msra.mxu0 0.0
    %831 = vmatprep.subr.mxu0 0.0
    %832 = vmatpush1.xpose.msra.mxu0 0.0
    %833 = vmatprep.subr.mxu0 0.0
    %834 = vmatpush1.xpose.msra.mxu0 0.0
    %835 = vmatprep.subr.mxu0 0.0
    %836 = vmatpush1.xpose.msra.mxu0 0.0
    %837 = vmatprep.subr.mxu0 0.0
    %838 = vmatpush1.xpose.msra.mxu0 0.0
    %839 = vmatprep.subr.mxu0 0.0
    %840 = vmatpush1.xpose.msra.mxu0 0.0
    %841 = vmatprep.subr.mxu0 0.0
    %842 = vmatpush1.xpose.msra.mxu0 0.0
    %843 = vmatprep.subr.mxu0 0.0
    %844 = vmatpush1.xpose.msra.mxu0 0.0
    %845 = vmatprep.subr.mxu0 0.0
    %846 = vmatpush1.xpose.msra.mxu0 0.0
    %847 = vmatprep.mubr.f32.mxu0 0.0
    %848 = vmatmul.mubr.f32.gmra.mrb[0].mxu0 %v562
    %v849 = vpop.f32.mrb[0].mxu0
    %v850 = vadd.f32 %v572, %v849
    %v851 = vpop.f32.mrb[0].mxu0
    %852 = vdwg.mxu0
    %853 = vmatprep.subr.mxu0 0.0
    %854 = vmatpush1.xpose.msra.mxu0 %v510
    %855 = vmatprep.subr.mxu0 0.0
    %856 = vmatpush1.xpose.msra.mxu0 0.0
    %857 = vmatprep.subr.mxu0 0.0
    %858 = vmatpush1.xpose.msra.mxu0 0.0
    %859 = vmatprep.subr.mxu0 0.0
    %860 = vmatpush1.xpose.msra.mxu0 0.0
    %861 = vmatprep.subr.mxu0 0.0
    %862 = vmatpush1.xpose.msra.mxu0 0.0
    %863 = vmatprep.subr.mxu0 0.0
    %864 = vmatpush1.xpose.msra.mxu0 0.0
    %865 = vmatprep.subr.mxu0 0.0
    %866 = vmatpush1.xpose.msra.mxu0 0.0
    %867 = vmatprep.subr.mxu0 0.0
    %868 = vmatpush1.xpose.msra.mxu0 0.0
    %869 = vmatprep.subr.mxu0 0.0
    %870 = vmatpush1.xpose.msra.mxu0 0.0
    %871 = vmatprep.subr.mxu0 0.0
    %872 = vmatpush1.xpose.msra.mxu0 0.0
    %873 = vmatprep.subr.mxu0 0.0
    %874 = vmatpush1.xpose.msra.mxu0 0.0
    %875 = vmatprep.subr.mxu0 0.0
    %876 = vmatpush1.xpose.msra.mxu0 0.0
    %877 = vmatprep.subr.mxu0 0.0
    %878 = vmatpush1.xpose.msra.mxu0 0.0
    %879 = vmatprep.subr.mxu0 0.0
    %880 = vmatpush1.xpose.msra.mxu0 0.0
    %881 = vmatprep.subr.mxu0 0.0
    %882 = vmatpush1.xpose.msra.mxu0 0.0
    %883 = vmatprep.subr.mxu0 0.0
    %884 = vmatpush1.xpose.msra.mxu0 0.0
    %885 = vmatprep.subr.mxu0 0.0
    %886 = vmatpush1.xpose.msra.mxu0 0.0
    %887 = vmatprep.subr.mxu0 0.0
    %888 = vmatpush1.xpose.msra.mxu0 0.0
    %889 = vmatprep.subr.mxu0 0.0
    %890 = vmatpush1.xpose.msra.mxu0 0.0
    %891 = vmatprep.subr.mxu0 0.0
    %892 = vmatpush1.xpose.msra.mxu0 0.0
    %893 = vmatprep.subr.mxu0 0.0
    %894 = vmatpush1.xpose.msra.mxu0 0.0
    %895 = vmatprep.subr.mxu0 0.0
    %896 = vmatpush1.xpose.msra.mxu0 0.0
    %897 = vmatprep.subr.mxu0 0.0
    %898 = vmatpush1.xpose.msra.mxu0 0.0
    %899 = vmatprep.subr.mxu0 0.0
    %900 = vmatpush1.xpose.msra.mxu0 0.0
    %901 = vmatprep.subr.mxu0 0.0
    %902 = vmatpush1.xpose.msra.mxu0 0.0
    %903 = vmatprep.subr.mxu0 0.0
    %904 = vmatpush1.xpose.msra.mxu0 0.0
    %905 = vmatprep.subr.mxu0 0.0
    %906 = vmatpush1.xpose.msra.mxu0 0.0
    %907 = vmatprep.subr.mxu0 0.0
    %908 = vmatpush1.xpose.msra.mxu0 0.0
    %909 = vmatprep.subr.mxu0 0.0
    %910 = vmatpush1.xpose.msra.mxu0 0.0
    %911 = vmatprep.subr.mxu0 0.0
    %912 = vmatpush1.xpose.msra.mxu0 0.0
    %913 = vmatprep.subr.mxu0 0.0
    %914 = vmatpush1.xpose.msra.mxu0 0.0
    %915 = vmatprep.subr.mxu0 0.0
    %916 = vmatpush1.xpose.msra.mxu0 0.0
    %917 = vmatprep.mubr.f32.mxu0 0.0
    %918 = vmatmul.mubr.f32.gmra.mrb[0].mxu0 %v545
    %v919 = vpop.f32.mrb[0].mxu0
    %v920 = vadd.f32 %v572, %v919
    %v921 = vpop.f32.mrb[0].mxu0
    %922 = vdwg.mxu0
    %923 = vmatprep.subr.mxu0 0.0
    %924 = vmatpush1.xpose.msra.mxu0 %v511
    %925 = vmatprep.subr.mxu0 0.0
    %926 = vmatpush1.xpose.msra.mxu0 0.0
    %927 = vmatprep.subr.mxu0 0.0
    %928 = vmatpush1.xpose.msra.mxu0 0.0
    %929 = vmatprep.subr.mxu0 0.0
    %930 = vmatpush1.xpose.msra.mxu0 0.0
    %931 = vmatprep.subr.mxu0 0.0
    %932 = vmatpush1.xpose.msra.mxu0 0.0
    %933 = vmatprep.subr.mxu0 0.0
    %934 = vmatpush1.xpose.msra.mxu0 0.0
    %935 = vmatprep.subr.mxu0 0.0
    %936 = vmatpush1.xpose.msra.mxu0 0.0
    %937 = vmatprep.subr.mxu0 0.0
    %938 = vmatpush1.xpose.msra.mxu0 0.0
    %939 = vmatprep.subr.mxu0 0.0
    %940 = vmatpush1.xpose.msra.mxu0 0.0
    %941 = vmatprep.subr.mxu0 0.0
    %942 = vmatpush1.xpose.msra.mxu0 0.0
    %943 = vmatprep.subr.mxu0 0.0
    %944 = vmatpush1.xpose.msra.mxu0 0.0
    %945 = vmatprep.subr.mxu0 0.0
    %946 = vmatpush1.xpose.msra.mxu0 0.0
    %947 = vmatprep.subr.mxu0 0.0
    %948 = vmatpush1.xpose.msra.mxu0 0.0
    %949 = vmatprep.subr.mxu0 0.0
    %950 = vmatpush1.xpose.msra.mxu0 0.0
    %951 = vmatprep.subr.mxu0 0.0
    %952 = vmatpush1.xpose.msra.mxu0 0.0
    %953 = vmatprep.subr.mxu0 0.0
    %954 = vmatpush1.xpose.msra.mxu0 0.0
    %955 = vmatprep.subr.mxu0 0.0
    %956 = vmatpush1.xpose.msra.mxu0 0.0
    %957 = vmatprep.subr.mxu0 0.0
    %958 = vmatpush1.xpose.msra.mxu0 0.0
    %959 = vmatprep.subr.mxu0 0.0
    %960 = vmatpush1.xpose.msra.mxu0 0.0
    %961 = vmatprep.subr.mxu0 0.0
    %962 = vmatpush1.xpose.msra.mxu0 0.0
    %963 = vmatprep.subr.mxu0 0.0
    %964 = vmatpush1.xpose.msra.mxu0 0.0
    %965 = vmatprep.subr.mxu0 0.0
    %966 = vmatpush1.xpose.msra.mxu0 0.0
    %967 = vmatprep.subr.mxu0 0.0
    %968 = vmatpush1.xpose.msra.mxu0 0.0
    %969 = vmatprep.subr.mxu0 0.0
    %970 = vmatpush1.xpose.msra.mxu0 0.0
    %971 = vmatprep.subr.mxu0 0.0
    %972 = vmatpush1.xpose.msra.mxu0 0.0
    %973 = vmatprep.subr.mxu0 0.0
    %974 = vmatpush1.xpose.msra.mxu0 0.0
    %975 = vmatprep.subr.mxu0 0.0
    %976 = vmatpush1.xpose.msra.mxu0 0.0
    %977 = vmatprep.subr.mxu0 0.0
    %978 = vmatpush1.xpose.msra.mxu0 0.0
    %979 = vmatprep.subr.mxu0 0.0
    %980 = vmatpush1.xpose.msra.mxu0 0.0
    %981 = vmatprep.subr.mxu0 0.0
    %982 = vmatpush1.xpose.msra.mxu0 0.0
    %983 = vmatprep.subr.mxu0 0.0
    %984 = vmatpush1.xpose.msra.mxu0 0.0
    %985 = vmatprep.subr.mxu0 0.0
    %986 = vmatpush1.xpose.msra.mxu0 0.0
    %987 = vmatprep.mubr.f32.mxu0 0.0
    %988 = vmatmul.mubr.f32.gmra.mrb[0].mxu0 %v559
    %v989 = vpop.f32.mrb[0].mxu0
    %v990 = vadd.f32 %v572, %v989
    %v991 = vpop.f32.mrb[0].mxu0
    %992 = vdwg.mxu0
    %993 = vmatprep.subr.mxu0 0.0
    %994 = vmatpush1.xpose.msra.mxu0 %v512
    %995 = vmatprep.subr.mxu0 0.0
    %996 = vmatpush1.xpose.msra.mxu0 0.0
    %997 = vmatprep.subr.mxu0 0.0
    %998 = vmatpush1.xpose.msra.mxu0 0.0
    %999 = vmatprep.subr.mxu0 0.0
    %1000 = vmatpush1.xpose.msra.mxu0 0.0
    %1001 = vmatprep.subr.mxu0 0.0
    %1002 = vmatpush1.xpose.msra.mxu0 0.0
    %1003 = vmatprep.subr.mxu0 0.0
    %1004 = vmatpush1.xpose.msra.mxu0 0.0
    %1005 = vmatprep.subr.mxu0 0.0
    %1006 = vmatpush1.xpose.msra.mxu0 0.0
    %1007 = vmatprep.subr.mxu0 0.0
    %1008 = vmatpush1.xpose.msra.mxu0 0.0
    %1009 = vmatprep.subr.mxu0 0.0
    %1010 = vmatpush1.xpose.msra.mxu0 0.0
    %1011 = vmatprep.subr.mxu0 0.0
    %1012 = vmatpush1.xpose.msra.mxu0 0.0
    %1013 = vmatprep.subr.mxu0 0.0
    %1014 = vmatpush1.xpose.msra.mxu0 0.0
    %1015 = vmatprep.subr.mxu0 0.0
    %1016 = vmatpush1.xpose.msra.mxu0 0.0
    %1017 = vmatprep.subr.mxu0 0.0
    %1018 = vmatpush1.xpose.msra.mxu0 0.0
    %1019 = vmatprep.subr.mxu0 0.0
    %1020 = vmatpush1.xpose.msra.mxu0 0.0
    %1021 = vmatprep.subr.mxu0 0.0
    %1022 = vmatpush1.xpose.msra.mxu0 0.0
    %1023 = vmatprep.subr.mxu0 0.0
    %1024 = vmatpush1.xpose.msra.mxu0 0.0
    %1025 = vmatprep.subr.mxu0 0.0
    %1026 = vmatpush1.xpose.msra.mxu0 0.0
    %1027 = vmatprep.subr.mxu0 0.0
    %1028 = vmatpush1.xpose.msra.mxu0 0.0
    %1029 = vmatprep.subr.mxu0 0.0
    %1030 = vmatpush1.xpose.msra.mxu0 0.0
    %1031 = vmatprep.subr.mxu0 0.0
    %1032 = vmatpush1.xpose.msra.mxu0 0.0
    %1033 = vmatprep.subr.mxu0 0.0
    %1034 = vmatpush1.xpose.msra.mxu0 0.0
    %1035 = vmatprep.subr.mxu0 0.0
    %1036 = vmatpush1.xpose.msra.mxu0 0.0
    %1037 = vmatprep.subr.mxu0 0.0
    %1038 = vmatpush1.xpose.msra.mxu0 0.0
    %1039 = vmatprep.subr.mxu0 0.0
    %1040 = vmatpush1.xpose.msra.mxu0 0.0
    %1041 = vmatprep.subr.mxu0 0.0
    %1042 = vmatpush1.xpose.msra.mxu0 0.0
    %1043 = vmatprep.subr.mxu0 0.0
    %1044 = vmatpush1.xpose.msra.mxu0 0.0
    %1045 = vmatprep.subr.mxu0 0.0
    %1046 = vmatpush1.xpose.msra.mxu0 0.0
    %1047 = vmatprep.subr.mxu0 0.0
    %1048 = vmatpush1.xpose.msra.mxu0 0.0
    %1049 = vmatprep.subr.mxu0 0.0
    %1050 = vmatpush1.xpose.msra.mxu0 0.0
    %1051 = vmatprep.subr.mxu0 0.0
    %1052 = vmatpush1.xpose.msra.mxu0 0.0
    %1053 = vmatprep.subr.mxu0 0.0
    %1054 = vmatpush1.xpose.msra.mxu0 0.0
    %1055 = vmatprep.subr.mxu0 0.0
    %1056 = vmatpush1.xpose.msra.mxu0 0.0
    %1057 = vmatprep.mubr.f32.mxu0 0.0
    %1058 = vmatmul.mubr.f32.gmra.mrb[0].mxu0 %v561
    %v1059 = vpop.f32.mrb[0].mxu0
    %v1060 = vadd.f32 %v572, %v1059
    %v1061 = vpop.f32.mrb[0].mxu0
    %1062 = vdwg.mxu0
    %1063 = vmatprep.subr.mxu0 0.0
    %1064 = vmatpush1.xpose.msra.mxu0 %v513
    %1065 = vmatprep.subr.mxu0 0.0
    %1066 = vmatpush1.xpose.msra.mxu0 0.0
    %1067 = vmatprep.subr.mxu0 0.0
    %1068 = vmatpush1.xpose.msra.mxu0 0.0
    %1069 = vmatprep.subr.mxu0 0.0
    %1070 = vmatpush1.xpose.msra.mxu0 0.0
    %1071 = vmatprep.subr.mxu0 0.0
    %1072 = vmatpush1.xpose.msra.mxu0 0.0
    %1073 = vmatprep.subr.mxu0 0.0
    %1074 = vmatpush1.xpose.msra.mxu0 0.0
    %1075 = vmatprep.subr.mxu0 0.0
    %1076 = vmatpush1.xpose.msra.mxu0 0.0
    %1077 = vmatprep.subr.mxu0 0.0
    %1078 = vmatpush1.xpose.msra.mxu0 0.0
    %1079 = vmatprep.subr.mxu0 0.0
    %1080 = vmatpush1.xpose.msra.mxu0 0.0
    %1081 = vmatprep.subr.mxu0 0.0
    %1082 = vmatpush1.xpose.msra.mxu0 0.0
    %1083 = vmatprep.subr.mxu0 0.0
    %1084 = vmatpush1.xpose.msra.mxu0 0.0
    %1085 = vmatprep.subr.mxu0 0.0
    %1086 = vmatpush1.xpose.msra.mxu0 0.0
    %1087 = vmatprep.subr.mxu0 0.0
    %1088 = vmatpush1.xpose.msra.mxu0 0.0
    %1089 = vmatprep.subr.mxu0 0.0
    %1090 = vmatpush1.xpose.msra.mxu0 0.0
    %1091 = vmatprep.subr.mxu0 0.0
    %1092 = vmatpush1.xpose.msra.mxu0 0.0
    %1093 = vmatprep.subr.mxu0 0.0
    %1094 = vmatpush1.xpose.msra.mxu0 0.0
    %1095 = vmatprep.subr.mxu0 0.0
    %1096 = vmatpush1.xpose.msra.mxu0 0.0
    %1097 = vmatprep.subr.mxu0 0.0
    %1098 = vmatpush1.xpose.msra.mxu0 0.0
    %1099 = vmatprep.subr.mxu0 0.0
    %1100 = vmatpush1.xpose.msra.mxu0 0.0
    %1101 = vmatprep.subr.mxu0 0.0
    %1102 = vmatpush1.xpose.msra.mxu0 0.0
    %1103 = vmatprep.subr.mxu0 0.0
    %1104 = vmatpush1.xpose.msra.mxu0 0.0
    %1105 = vmatprep.subr.mxu0 0.0
    %1106 = vmatpush1.xpose.msra.mxu0 0.0
    %1107 = vmatprep.subr.mxu0 0.0
    %1108 = vmatpush1.xpose.msra.mxu0 0.0
    %1109 = vmatprep.subr.mxu0 0.0
    %1110 = vmatpush1.xpose.msra.mxu0 0.0
    %1111 = vmatprep.subr.mxu0 0.0
    %1112 = vmatpush1.xpose.msra.mxu0 0.0
    %1113 = vmatprep.subr.mxu0 0.0
    %1114 = vmatpush1.xpose.msra.mxu0 0.0
    %1115 = vmatprep.subr.mxu0 0.0
    %1116 = vmatpush1.xpose.msra.mxu0 0.0
    %1117 = vmatprep.subr.mxu0 0.0
    %1118 = vmatpush1.xpose.msra.mxu0 0.0
    %1119 = vmatprep.subr.mxu0 0.0
    %1120 = vmatpush1.xpose.msra.mxu0 0.0
    %1121 = vmatprep.subr.mxu0 0.0
    %1122 = vmatpush1.xpose.msra.mxu0 0.0
    %1123 = vmatprep.subr.mxu0 0.0
    %1124 = vmatpush1.xpose.msra.mxu0 0.0
    %1125 = vmatprep.subr.mxu0 0.0
    %1126 = vmatpush1.xpose.msra.mxu0 0.0
    %1127 = vmatprep.mubr.f32.mxu0 0.0
    %1128 = vmatmul.mubr.f32.gmra.mrb[0].mxu0 %v563
    %v1129 = vpop.f32.mrb[0].mxu0
    %v1130 = vadd.f32 %v572, %v1129
    %v1131 = vpop.f32.mrb[0].mxu0
    %1132 = vdwg.mxu0
    %vm1133 = vcmask 57344
    %v1134 = vsel %vm1133, %v640, -inf
    %1135 = vmax.xlane.f32.xlu0 %v1134
    %v1136 = vpop.xlane.xlu0 %1135
    %v1137 = vsel %vm1133, %v710, -inf
    %1138 = vmax.xlane.f32.xlu0 %v1137
    %v1139 = vpop.xlane.xlu0 %1138
    %v1140 = vsel %vm1133, %v780, -inf
    %1141 = vmax.xlane.f32.xlu0 %v1140
    %v1142 = vpop.xlane.xlu0 %1141
    %v1143 = vsel %vm1133, %v850, -inf
    %1144 = vmax.xlane.f32.xlu0 %v1143
    %v1145 = vpop.xlane.xlu0 %1144
    %v1146 = vsel %vm1133, %v920, -inf
    %1147 = vmax.xlane.f32.xlu0 %v1146
    %v1148 = vpop.xlane.xlu0 %1147
    %v1149 = vsel %vm1133, %v990, -inf
    %1150 = vmax.xlane.f32.xlu0 %v1149
    %v1151 = vpop.xlane.xlu0 %1150
    %v1152 = vsel %vm1133, %v1060, -inf
    %1153 = vmax.xlane.f32.xlu0 %v1152
    %v1154 = vpop.xlane.xlu0 %1153
    %v1155 = vsel %vm1133, %v1130, -inf
    %1156 = vmax.xlane.f32.xlu0 %v1155
    %v1157 = vpop.xlane.xlu0 %1156
    %v1158 = vsub.f32 %v640, %v1136
    %v1159 = vsub.f32 %v710, %v1139
    %v1160 = vsub.f32 %v780, %v1142
    %v1161 = vsub.f32 %v850, %v1145
    %v1162 = vsub.f32 %v920, %v1148
    %v1163 = vsub.f32 %v990, %v1151
    %v1164 = vsub.f32 %v1060, %v1154
    %v1165 = vsub.f32 %v1130, %v1157
    %v1166 = vmul.f32 %v1158, 1.442695
    %v1167 = vpow.pop %v1166
    %v1168 = vmul.f32 %v1159, 1.442695
    %v1169 = vpow.pop %v1168
    %v1170 = vmul.f32 %v1160, 1.442695
    %v1171 = vpow.pop %v1170
    %v1172 = vmul.f32 %v1161, 1.442695
    %v1173 = vpow.pop %v1172
    %v1174 = vmul.f32 %v1162, 1.442695
    %v1175 = vpow.pop %v1174
    %v1176 = vmul.f32 %v1163, 1.442695
    %v1177 = vpow.pop %v1176
    %v1178 = vmul.f32 %v1164, 1.442695
    %v1179 = vpow.pop %v1178
    %v1180 = vmul.f32 %v1165, 1.442695
    %v1181 = vpow.pop %v1180
    %v1182 = vsel %vm1133, %v1167, 0.0
    %1183 = vadd.xlane.f32.xlu0 %v1182
    %v1184 = vpop.xlane.xlu0 %1183
    %v1185 = vsel %vm1133, %v1169, 0.0
    %1186 = vadd.xlane.f32.xlu0 %v1185
    %v1187 = vpop.xlane.xlu0 %1186
    %v1188 = vsel %vm1133, %v1171, 0.0
    %1189 = vadd.xlane.f32.xlu0 %v1188
    %v1190 = vpop.xlane.xlu0 %1189
    %v1191 = vsel %vm1133, %v1173, 0.0
    %1192 = vadd.xlane.f32.xlu0 %v1191
    %v1193 = vpop.xlane.xlu0 %1192
    %v1194 = vsel %vm1133, %v1175, 0.0
    %1195 = vadd.xlane.f32.xlu0 %v1194
    %v1196 = vpop.xlane.xlu0 %1195
    %v1197 = vsel %vm1133, %v1177, 0.0
    %1198 = vadd.xlane.f32.xlu0 %v1197
    %v1199 = vpop.xlane.xlu0 %1198
    %v1200 = vsel %vm1133, %v1179, 0.0
    %1201 = vadd.xlane.f32.xlu0 %v1200
    %v1202 = vpop.xlane.xlu0 %1201
    %v1203 = vsel %vm1133, %v1181, 0.0
    %1204 = vadd.xlane.f32.xlu0 %v1203
    %v1205 = vpop.xlane.xlu0 %1204
    %v1206 = vrcp.pop %v1184
    %v1207 = vrcp.pop %v1187
    %v1208 = vrcp.pop %v1190
    %v1209 = vrcp.pop %v1193
    %v1210 = vrcp.pop %v1196
    %v1211 = vrcp.pop %v1199
    %v1212 = vrcp.pop %v1202
    %v1213 = vrcp.pop %v1205
    %v1214 = vmul.f32 %v1167, %v1206
    %v1215 = vmul.f32 %v1169, %v1207
    %v1216 = vmul.f32 %v1171, %v1208
    %v1217 = vmul.f32 %v1173, %v1209
    %v1218 = vmul.f32 %v1175, %v1210
    %v1219 = vmul.f32 %v1177, %v1211
    %v1220 = vmul.f32 %v1179, %v1212
    %v1221 = vmul.f32 %v1181, %v1213
    %vm1222 = vcmask 64512
    %v1224 = vsel %vm1222, %v1214, 0
    %1226 = vmatprep.subr.mxu0 0.0
    %1227 = vmatpush1.msra.mxu0 %v506
    %1228 = vmatprep.subr.mxu0 0.0
    %1229 = vmatpush1.msra.mxu0 0.0
    %1230 = vmatprep.subr.mxu0 0.0
    %1231 = vmatpush1.msra.mxu0 0.0
    %1232 = vmatprep.subr.mxu0 0.0
    %1233 = vmatpush1.msra.mxu0 0.0
    %1234 = vmatprep.subr.mxu0 0.0
    %1235 = vmatpush1.msra.mxu0 0.0
    %1236 = vmatprep.subr.mxu0 0.0
    %1237 = vmatpush1.msra.mxu0 0.0
    %1238 = vmatprep.subr.mxu0 0.0
    %1239 = vmatpush1.msra.mxu0 0.0
    %1240 = vmatprep.subr.mxu0 0.0
    %1241 = vmatpush1.msra.mxu0 0.0
    %1242 = vmatprep.subr.mxu0 0.0
    %1243 = vmatpush1.msra.mxu0 0.0
    %1244 = vmatprep.subr.mxu0 0.0
    %1245 = vmatpush1.msra.mxu0 0.0
    %1246 = vmatprep.subr.mxu0 0.0
    %1247 = vmatpush1.msra.mxu0 0.0
    %1248 = vmatprep.subr.mxu0 0.0
    %1249 = vmatpush1.msra.mxu0 0.0
    %1250 = vmatprep.subr.mxu0 0.0
    %1251 = vmatpush1.msra.mxu0 0.0
    %1252 = vmatprep.subr.mxu0 0.0
    %1253 = vmatpush1.msra.mxu0 0.0
    %1254 = vmatprep.subr.mxu0 0.0
    %1255 = vmatpush1.msra.mxu0 0.0
    %1256 = vmatprep.subr.mxu0 0.0
    %1257 = vmatpush1.msra.mxu0 0.0
    %1258 = vmatprep.subr.mxu0 0.0
    %1259 = vmatpush1.msra.mxu0 0.0
    %1260 = vmatprep.subr.mxu0 0.0
    %1261 = vmatpush1.msra.mxu0 0.0
    %1262 = vmatprep.subr.mxu0 0.0
    %1263 = vmatpush1.msra.mxu0 0.0
    %1264 = vmatprep.subr.mxu0 0.0
    %1265 = vmatpush1.msra.mxu0 0.0
    %1266 = vmatprep.subr.mxu0 0.0
    %1267 = vmatpush1.msra.mxu0 0.0
    %1268 = vmatprep.subr.mxu0 0.0
    %1269 = vmatpush1.msra.mxu0 0.0
    %1270 = vmatprep.subr.mxu0 0.0
    %1271 = vmatpush1.msra.mxu0 0.0
    %1272 = vmatprep.subr.mxu0 0.0
    %1273 = vmatpush1.msra.mxu0 0.0
    %1274 = vmatprep.subr.mxu0 0.0
    %1275 = vmatpush1.msra.mxu0 0.0
    %1276 = vmatprep.subr.mxu0 0.0
    %1277 = vmatpush1.msra.mxu0 0.0
    %1278 = vmatprep.subr.mxu0 0.0
    %1279 = vmatpush1.msra.mxu0 0.0
    %1280 = vmatprep.subr.mxu0 0.0
    %1281 = vmatpush1.msra.mxu0 0.0
    %1282 = vmatprep.subr.mxu0 0.0
    %1283 = vmatpush1.msra.mxu0 0.0
    %1284 = vmatprep.subr.mxu0 0.0
    %1285 = vmatpush1.msra.mxu0 0.0
    %1286 = vmatprep.subr.mxu0 0.0
    %1287 = vmatpush1.msra.mxu0 0.0
    %1288 = vmatprep.subr.mxu0 0.0
    %1289 = vmatpush1.msra.mxu0 0.0
    %1290 = vmatprep.mubr.f32.mxu0 0.0
    %1291 = vmatmul.mubr.f32.gmra.mrb[0].mxu0 %v1224
    %v1292 = vpop.f32.mrb[0].mxu0
    %v1293 = vadd.f32 0.0, %v1292
    %v1294 = vpop.f32.mrb[0].mxu0
    %1295 = vdwg.mxu0
    %v1297 = vsel %vm1222, %v1215, 0
    %1299 = vmatprep.subr.mxu0 0.0
    %1300 = vmatpush1.msra.mxu0 %v507
    %1301 = vmatprep.subr.mxu0 0.0
    %1302 = vmatpush1.msra.mxu0 0.0
    %1303 = vmatprep.subr.mxu0 0.0
    %1304 = vmatpush1.msra.mxu0 0.0
    %1305 = vmatprep.subr.mxu0 0.0
    %1306 = vmatpush1.msra.mxu0 0.0
    %1307 = vmatprep.subr.mxu0 0.0
    %1308 = vmatpush1.msra.mxu0 0.0
    %1309 = vmatprep.subr.mxu0 0.0
    %1310 = vmatpush1.msra.mxu0 0.0
    %1311 = vmatprep.subr.mxu0 0.0
    %1312 = vmatpush1.msra.mxu0 0.0
    %1313 = vmatprep.subr.mxu0 0.0
    %1314 = vmatpush1.msra.mxu0 0.0
    %1315 = vmatprep.subr.mxu0 0.0
    %1316 = vmatpush1.msra.mxu0 0.0
    %1317 = vmatprep.subr.mxu0 0.0
    %1318 = vmatpush1.msra.mxu0 0.0
    %1319 = vmatprep.subr.mxu0 0.0
    %1320 = vmatpush1.msra.mxu0 0.0
    %1321 = vmatprep.subr.mxu0 0.0
    %1322 = vmatpush1.msra.mxu0 0.0
    %1323 = vmatprep.subr.mxu0 0.0
    %1324 = vmatpush1.msra.mxu0 0.0
    %1325 = vmatprep.subr.mxu0 0.0
    %1326 = vmatpush1.msra.mxu0 0.0
    %1327 = vmatprep.subr.mxu0 0.0
    %1328 = vmatpush1.msra.mxu0 0.0
    %1329 = vmatprep.subr.mxu0 0.0
    %1330 = vmatpush1.msra.mxu0 0.0
    %1331 = vmatprep.subr.mxu0 0.0
    %1332 = vmatpush1.msra.mxu0 0.0
    %1333 = vmatprep.subr.mxu0 0.0
    %1334 = vmatpush1.msra.mxu0 0.0
    %1335 = vmatprep.subr.mxu0 0.0
    %1336 = vmatpush1.msra.mxu0 0.0
    %1337 = vmatprep.subr.mxu0 0.0
    %1338 = vmatpush1.msra.mxu0 0.0
    %1339 = vmatprep.subr.mxu0 0.0
    %1340 = vmatpush1.msra.mxu0 0.0
    %1341 = vmatprep.subr.mxu0 0.0
    %1342 = vmatpush1.msra.mxu0 0.0
    %1343 = vmatprep.subr.mxu0 0.0
    %1344 = vmatpush1.msra.mxu0 0.0
    %1345 = vmatprep.subr.mxu0 0.0
    %1346 = vmatpush1.msra.mxu0 0.0
    %1347 = vmatprep.subr.mxu0 0.0
    %1348 = vmatpush1.msra.mxu0 0.0
    %1349 = vmatprep.subr.mxu0 0.0
    %1350 = vmatpush1.msra.mxu0 0.0
    %1351 = vmatprep.subr.mxu0 0.0
    %1352 = vmatpush1.msra.mxu0 0.0
    %1353 = vmatprep.subr.mxu0 0.0
    %1354 = vmatpush1.msra.mxu0 0.0
    %1355 = vmatprep.subr.mxu0 0.0
    %1356 = vmatpush1.msra.mxu0 0.0
    %1357 = vmatprep.subr.mxu0 0.0
    %1358 = vmatpush1.msra.mxu0 0.0
    %1359 = vmatprep.subr.mxu0 0.0
    %1360 = vmatpush1.msra.mxu0 0.0
    %1361 = vmatprep.subr.mxu0 0.0
    %1362 = vmatpush1.msra.mxu0 0.0
    %1363 = vmatprep.mubr.f32.mxu0 0.0
    %1364 = vmatmul.mubr.f32.gmra.mrb[0].mxu0 %v1297
    %v1365 = vpop.f32.mrb[0].mxu0
    %v1366 = vadd.f32 0.0, %v1365
    %v1367 = vpop.f32.mrb[0].mxu0
    %1368 = vdwg.mxu0
    %v1370 = vsel %vm1222, %v1216, 0
    %1372 = vmatprep.subr.mxu0 0.0
    %1373 = vmatpush1.msra.mxu0 %v508
    %1374 = vmatprep.subr.mxu0 0.0
    %1375 = vmatpush1.msra.mxu0 0.0
    %1376 = vmatprep.subr.mxu0 0.0
    %1377 = vmatpush1.msra.mxu0 0.0
    %1378 = vmatprep.subr.mxu0 0.0
    %1379 = vmatpush1.msra.mxu0 0.0
    %1380 = vmatprep.subr.mxu0 0.0
    %1381 = vmatpush1.msra.mxu0 0.0
    %1382 = vmatprep.subr.mxu0 0.0
    %1383 = vmatpush1.msra.mxu0 0.0
    %1384 = vmatprep.subr.mxu0 0.0
    %1385 = vmatpush1.msra.mxu0 0.0
    %1386 = vmatprep.subr.mxu0 0.0
    %1387 = vmatpush1.msra.mxu0 0.0
    %1388 = vmatprep.subr.mxu0 0.0
    %1389 = vmatpush1.msra.mxu0 0.0
    %1390 = vmatprep.subr.mxu0 0.0
    %1391 = vmatpush1.msra.mxu0 0.0
    %1392 = vmatprep.subr.mxu0 0.0
    %1393 = vmatpush1.msra.mxu0 0.0
    %1394 = vmatprep.subr.mxu0 0.0
    %1395 = vmatpush1.msra.mxu0 0.0
    %1396 = vmatprep.subr.mxu0 0.0
    %1397 = vmatpush1.msra.mxu0 0.0
    %1398 = vmatprep.subr.mxu0 0.0
    %1399 = vmatpush1.msra.mxu0 0.0
    %1400 = vmatprep.subr.mxu0 0.0
    %1401 = vmatpush1.msra.mxu0 0.0
    %1402 = vmatprep.subr.mxu0 0.0
    %1403 = vmatpush1.msra.mxu0 0.0
    %1404 = vmatprep.subr.mxu0 0.0
    %1405 = vmatpush1.msra.mxu0 0.0
    %1406 = vmatprep.subr.mxu0 0.0
    %1407 = vmatpush1.msra.mxu0 0.0
    %1408 = vmatprep.subr.mxu0 0.0
    %1409 = vmatpush1.msra.mxu0 0.0
    %1410 = vmatprep.subr.mxu0 0.0
    %1411 = vmatpush1.msra.mxu0 0.0
    %1412 = vmatprep.subr.mxu0 0.0
    %1413 = vmatpush1.msra.mxu0 0.0
    %1414 = vmatprep.subr.mxu0 0.0
    %1415 = vmatpush1.msra.mxu0 0.0
    %1416 = vmatprep.subr.mxu0 0.0
    %1417 = vmatpush1.msra.mxu0 0.0
    %1418 = vmatprep.subr.mxu0 0.0
    %1419 = vmatpush1.msra.mxu0 0.0
    %1420 = vmatprep.subr.mxu0 0.0
    %1421 = vmatpush1.msra.mxu0 0.0
    %1422 = vmatprep.subr.mxu0 0.0
    %1423 = vmatpush1.msra.mxu0 0.0
    %1424 = vmatprep.subr.mxu0 0.0
    %1425 = vmatpush1.msra.mxu0 0.0
    %1426 = vmatprep.subr.mxu0 0.0
    %1427 = vmatpush1.msra.mxu0 0.0
    %1428 = vmatprep.subr.mxu0 0.0
    %1429 = vmatpush1.msra.mxu0 0.0
    %1430 = vmatprep.subr.mxu0 0.0
    %1431 = vmatpush1.msra.mxu0 0.0
    %1432 = vmatprep.subr.mxu0 0.0
    %1433 = vmatpush1.msra.mxu0 0.0
    %1434 = vmatprep.subr.mxu0 0.0
    %1435 = vmatpush1.msra.mxu0 0.0
    %1436 = vmatprep.mubr.f32.mxu0 0.0
    %1437 = vmatmul.mubr.f32.gmra.mrb[0].mxu0 %v1370
    %v1438 = vpop.f32.mrb[0].mxu0
    %v1439 = vadd.f32 0.0, %v1438
    %v1440 = vpop.f32.mrb[0].mxu0
    %1441 = vdwg.mxu0
    %v1443 = vsel %vm1222, %v1217, 0
    %1445 = vmatprep.subr.mxu0 0.0
    %1446 = vmatpush1.msra.mxu0 %v509
    %1447 = vmatprep.subr.mxu0 0.0
    %1448 = vmatpush1.msra.mxu0 0.0
    %1449 = vmatprep.subr.mxu0 0.0
    %1450 = vmatpush1.msra.mxu0 0.0
    %1451 = vmatprep.subr.mxu0 0.0
    %1452 = vmatpush1.msra.mxu0 0.0
    %1453 = vmatprep.subr.mxu0 0.0
    %1454 = vmatpush1.msra.mxu0 0.0
    %1455 = vmatprep.subr.mxu0 0.0
    %1456 = vmatpush1.msra.mxu0 0.0
    %1457 = vmatprep.subr.mxu0 0.0
    %1458 = vmatpush1.msra.mxu0 0.0
    %1459 = vmatprep.subr.mxu0 0.0
    %1460 = vmatpush1.msra.mxu0 0.0
    %1461 = vmatprep.subr.mxu0 0.0
    %1462 = vmatpush1.msra.mxu0 0.0
    %1463 = vmatprep.subr.mxu0 0.0
    %1464 = vmatpush1.msra.mxu0 0.0
    %1465 = vmatprep.subr.mxu0 0.0
    %1466 = vmatpush1.msra.mxu0 0.0
    %1467 = vmatprep.subr.mxu0 0.0
    %1468 = vmatpush1.msra.mxu0 0.0
    %1469 = vmatprep.subr.mxu0 0.0
    %1470 = vmatpush1.msra.mxu0 0.0
    %1471 = vmatprep.subr.mxu0 0.0
    %1472 = vmatpush1.msra.mxu0 0.0
    %1473 = vmatprep.subr.mxu0 0.0
    %1474 = vmatpush1.msra.mxu0 0.0
    %1475 = vmatprep.subr.mxu0 0.0
    %1476 = vmatpush1.msra.mxu0 0.0
    %1477 = vmatprep.subr.mxu0 0.0
    %1478 = vmatpush1.msra.mxu0 0.0
    %1479 = vmatprep.subr.mxu0 0.0
    %1480 = vmatpush1.msra.mxu0 0.0
    %1481 = vmatprep.subr.mxu0 0.0
    %1482 = vmatpush1.msra.mxu0 0.0
    %1483 = vmatprep.subr.mxu0 0.0
    %1484 = vmatpush1.msra.mxu0 0.0
    %1485 = vmatprep.subr.mxu0 0.0
    %1486 = vmatpush1.msra.mxu0 0.0
    %1487 = vmatprep.subr.mxu0 0.0
    %1488 = vmatpush1.msra.mxu0 0.0
    %1489 = vmatprep.subr.mxu0 0.0
    %1490 = vmatpush1.msra.mxu0 0.0
    %1491 = vmatprep.subr.mxu0 0.0
    %1492 = vmatpush1.msra.mxu0 0.0
    %1493 = vmatprep.subr.mxu0 0.0
    %1494 = vmatpush1.msra.mxu0 0.0
    %1495 = vmatprep.subr.mxu0 0.0
    %1496 = vmatpush1.msra.mxu0 0.0
    %1497 = vmatprep.subr.mxu0 0.0
    %1498 = vmatpush1.msra.mxu0 0.0
    %1499 = vmatprep.subr.mxu0 0.0
    %1500 = vmatpush1.msra.mxu0 0.0
    %1501 = vmatprep.subr.mxu0 0.0
    %1502 = vmatpush1.msra.mxu0 0.0
    %1503 = vmatprep.subr.mxu0 0.0
    %1504 = vmatpush1.msra.mxu0 0.0
    %1505 = vmatprep.subr.mxu0 0.0
    %1506 = vmatpush1.msra.mxu0 0.0
    %1507 = vmatprep.subr.mxu0 0.0
    %1508 = vmatpush1.msra.mxu0 0.0
    %1509 = vmatprep.mubr.f32.mxu0 0.0
    %1510 = vmatmul.mubr.f32.gmra.mrb[0].mxu0 %v1443
    %v1511 = vpop.f32.mrb[0].mxu0
    %v1512 = vadd.f32 0.0, %v1511
    %v1513 = vpop.f32.mrb[0].mxu0
    %1514 = vdwg.mxu0
    %v1516 = vsel %vm1222, %v1218, 0
    %1518 = vmatprep.subr.mxu0 0.0
    %1519 = vmatpush1.msra.mxu0 %v510
    %1520 = vmatprep.subr.mxu0 0.0
    %1521 = vmatpush1.msra.mxu0 0.0
    %1522 = vmatprep.subr.mxu0 0.0
    %1523 = vmatpush1.msra.mxu0 0.0
    %1524 = vmatprep.subr.mxu0 0.0
    %1525 = vmatpush1.msra.mxu0 0.0
    %1526 = vmatprep.subr.mxu0 0.0
    %1527 = vmatpush1.msra.mxu0 0.0
    %1528 = vmatprep.subr.mxu0 0.0
    %1529 = vmatpush1.msra.mxu0 0.0
    %1530 = vmatprep.subr.mxu0 0.0
    %1531 = vmatpush1.msra.mxu0 0.0
    %1532 = vmatprep.subr.mxu0 0.0
    %1533 = vmatpush1.msra.mxu0 0.0
    %1534 = vmatprep.subr.mxu0 0.0
    %1535 = vmatpush1.msra.mxu0 0.0
    %1536 = vmatprep.subr.mxu0 0.0
    %1537 = vmatpush1.msra.mxu0 0.0
    %1538 = vmatprep.subr.mxu0 0.0
    %1539 = vmatpush1.msra.mxu0 0.0
    %1540 = vmatprep.subr.mxu0 0.0
    %1541 = vmatpush1.msra.mxu0 0.0
    %1542 = vmatprep.subr.mxu0 0.0
    %1543 = vmatpush1.msra.mxu0 0.0
    %1544 = vmatprep.subr.mxu0 0.0
    %1545 = vmatpush1.msra.mxu0 0.0
    %1546 = vmatprep.subr.mxu0 0.0
    %1547 = vmatpush1.msra.mxu0 0.0
    %1548 = vmatprep.subr.mxu0 0.0
    %1549 = vmatpush1.msra.mxu0 0.0
    %1550 = vmatprep.subr.mxu0 0.0
    %1551 = vmatpush1.msra.mxu0 0.0
    %1552 = vmatprep.subr.mxu0 0.0
    %1553 = vmatpush1.msra.mxu0 0.0
    %1554 = vmatprep.subr.mxu0 0.0
    %1555 = vmatpush1.msra.mxu0 0.0
    %1556 = vmatprep.subr.mxu0 0.0
    %1557 = vmatpush1.msra.mxu0 0.0
    %1558 = vmatprep.subr.mxu0 0.0
    %1559 = vmatpush1.msra.mxu0 0.0
    %1560 = vmatprep.subr.mxu0 0.0
    %1561 = vmatpush1.msra.mxu0 0.0
    %1562 = vmatprep.subr.mxu0 0.0
    %1563 = vmatpush1.msra.mxu0 0.0
    %1564 = vmatprep.subr.mxu0 0.0
    %1565 = vmatpush1.msra.mxu0 0.0
    %1566 = vmatprep.subr.mxu0 0.0
    %1567 = vmatpush1.msra.mxu0 0.0
    %1568 = vmatprep.subr.mxu0 0.0
    %1569 = vmatpush1.msra.mxu0 0.0
    %1570 = vmatprep.subr.mxu0 0.0
    %1571 = vmatpush1.msra.mxu0 0.0
    %1572 = vmatprep.subr.mxu0 0.0
    %1573 = vmatpush1.msra.mxu0 0.0
    %1574 = vmatprep.subr.mxu0 0.0
    %1575 = vmatpush1.msra.mxu0 0.0
    %1576 = vmatprep.subr.mxu0 0.0
    %1577 = vmatpush1.msra.mxu0 0.0
    %1578 = vmatprep.subr.mxu0 0.0
    %1579 = vmatpush1.msra.mxu0 0.0
    %1580 = vmatprep.subr.mxu0 0.0
    %1581 = vmatpush1.msra.mxu0 0.0
    %1582 = vmatprep.mubr.f32.mxu0 0.0
    %1583 = vmatmul.mubr.f32.gmra.mrb[0].mxu0 %v1516
    %v1584 = vpop.f32.mrb[0].mxu0
    %v1585 = vadd.f32 0.0, %v1584
    %v1586 = vpop.f32.mrb[0].mxu0
    %1587 = vdwg.mxu0
    %v1589 = vsel %vm1222, %v1219, 0
    %1591 = vmatprep.subr.mxu0 0.0
    %1592 = vmatpush1.msra.mxu0 %v511
    %1593 = vmatprep.subr.mxu0 0.0
    %1594 = vmatpush1.msra.mxu0 0.0
    %1595 = vmatprep.subr.mxu0 0.0
    %1596 = vmatpush1.msra.mxu0 0.0
    %1597 = vmatprep.subr.mxu0 0.0
    %1598 = vmatpush1.msra.mxu0 0.0
    %1599 = vmatprep.subr.mxu0 0.0
    %1600 = vmatpush1.msra.mxu0 0.0
    %1601 = vmatprep.subr.mxu0 0.0
    %1602 = vmatpush1.msra.mxu0 0.0
    %1603 = vmatprep.subr.mxu0 0.0
    %1604 = vmatpush1.msra.mxu0 0.0
    %1605 = vmatprep.subr.mxu0 0.0
    %1606 = vmatpush1.msra.mxu0 0.0
    %1607 = vmatprep.subr.mxu0 0.0
    %1608 = vmatpush1.msra.mxu0 0.0
    %1609 = vmatprep.subr.mxu0 0.0
    %1610 = vmatpush1.msra.mxu0 0.0
    %1611 = vmatprep.subr.mxu0 0.0
    %1612 = vmatpush1.msra.mxu0 0.0
    %1613 = vmatprep.subr.mxu0 0.0
    %1614 = vmatpush1.msra.mxu0 0.0
    %1615 = vmatprep.subr.mxu0 0.0
    %1616 = vmatpush1.msra.mxu0 0.0
    %1617 = vmatprep.subr.mxu0 0.0
    %1618 = vmatpush1.msra.mxu0 0.0
    %1619 = vmatprep.subr.mxu0 0.0
    %1620 = vmatpush1.msra.mxu0 0.0
    %1621 = vmatprep.subr.mxu0 0.0
    %1622 = vmatpush1.msra.mxu0 0.0
    %1623 = vmatprep.subr.mxu0 0.0
    %1624 = vmatpush1.msra.mxu0 0.0
    %1625 = vmatprep.subr.mxu0 0.0
    %1626 = vmatpush1.msra.mxu0 0.0
    %1627 = vmatprep.subr.mxu0 0.0
    %1628 = vmatpush1.msra.mxu0 0.0
    %1629 = vmatprep.subr.mxu0 0.0
    %1630 = vmatpush1.msra.mxu0 0.0
    %1631 = vmatprep.subr.mxu0 0.0
    %1632 = vmatpush1.msra.mxu0 0.0
    %1633 = vmatprep.subr.mxu0 0.0
    %1634 = vmatpush1.msra.mxu0 0.0
    %1635 = vmatprep.subr.mxu0 0.0
    %1636 = vmatpush1.msra.mxu0 0.0
    %1637 = vmatprep.subr.mxu0 0.0
    %1638 = vmatpush1.msra.mxu0 0.0
    %1639 = vmatprep.subr.mxu0 0.0
    %1640 = vmatpush1.msra.mxu0 0.0
    %1641 = vmatprep.subr.mxu0 0.0
    %1642 = vmatpush1.msra.mxu0 0.0
    %1643 = vmatprep.subr.mxu0 0.0
    %1644 = vmatpush1.msra.mxu0 0.0
    %1645 = vmatprep.subr.mxu0 0.0
    %1646 = vmatpush1.msra.mxu0 0.0
    %1647 = vmatprep.subr.mxu0 0.0
    %1648 = vmatpush1.msra.mxu0 0.0
    %1649 = vmatprep.subr.mxu0 0.0
    %1650 = vmatpush1.msra.mxu0 0.0
    %1651 = vmatprep.subr.mxu0 0.0
    %1652 = vmatpush1.msra.mxu0 0.0
    %1653 = vmatprep.subr.mxu0 0.0
    %1654 = vmatpush1.msra.mxu0 0.0
    %1655 = vmatprep.mubr.f32.mxu0 0.0
    %1656 = vmatmul.mubr.f32.gmra.mrb[0].mxu0 %v1589
    %v1657 = vpop.f32.mrb[0].mxu0
    %v1658 = vadd.f32 0.0, %v1657
    %v1659 = vpop.f32.mrb[0].mxu0
    %1660 = vdwg.mxu0
    %v1662 = vsel %vm1222, %v1220, 0
    %1664 = vmatprep.subr.mxu0 0.0
    %1665 = vmatpush1.msra.mxu0 %v512
    %1666 = vmatprep.subr.mxu0 0.0
    %1667 = vmatpush1.msra.mxu0 0.0
    %1668 = vmatprep.subr.mxu0 0.0
    %1669 = vmatpush1.msra.mxu0 0.0
    %1670 = vmatprep.subr.mxu0 0.0
    %1671 = vmatpush1.msra.mxu0 0.0
    %1672 = vmatprep.subr.mxu0 0.0
    %1673 = vmatpush1.msra.mxu0 0.0
    %1674 = vmatprep.subr.mxu0 0.0
    %1675 = vmatpush1.msra.mxu0 0.0
    %1676 = vmatprep.subr.mxu0 0.0
    %1677 = vmatpush1.msra.mxu0 0.0
    %1678 = vmatprep.subr.mxu0 0.0
    %1679 = vmatpush1.msra.mxu0 0.0
    %1680 = vmatprep.subr.mxu0 0.0
    %1681 = vmatpush1.msra.mxu0 0.0
    %1682 = vmatprep.subr.mxu0 0.0
    %1683 = vmatpush1.msra.mxu0 0.0
    %1684 = vmatprep.subr.mxu0 0.0
    %1685 = vmatpush1.msra.mxu0 0.0
    %1686 = vmatprep.subr.mxu0 0.0
    %1687 = vmatpush1.msra.mxu0 0.0
    %1688 = vmatprep.subr.mxu0 0.0
    %1689 = vmatpush1.msra.mxu0 0.0
    %1690 = vmatprep.subr.mxu0 0.0
    %1691 = vmatpush1.msra.mxu0 0.0
    %1692 = vmatprep.subr.mxu0 0.0
    %1693 = vmatpush1.msra.mxu0 0.0
    %1694 = vmatprep.subr.mxu0 0.0
    %1695 = vmatpush1.msra.mxu0 0.0
    %1696 = vmatprep.subr.mxu0 0.0
    %1697 = vmatpush1.msra.mxu0 0.0
    %1698 = vmatprep.subr.mxu0 0.0
    %1699 = vmatpush1.msra.mxu0 0.0
    %1700 = vmatprep.subr.mxu0 0.0
    %1701 = vmatpush1.msra.mxu0 0.0
    %1702 = vmatprep.subr.mxu0 0.0
    %1703 = vmatpush1.msra.mxu0 0.0
    %1704 = vmatprep.subr.mxu0 0.0
    %1705 = vmatpush1.msra.mxu0 0.0
    %1706 = vmatprep.subr.mxu0 0.0
    %1707 = vmatpush1.msra.mxu0 0.0
    %1708 = vmatprep.subr.mxu0 0.0
    %1709 = vmatpush1.msra.mxu0 0.0
    %1710 = vmatprep.subr.mxu0 0.0
    %1711 = vmatpush1.msra.mxu0 0.0
    %1712 = vmatprep.subr.mxu0 0.0
    %1713 = vmatpush1.msra.mxu0 0.0
    %1714 = vmatprep.subr.mxu0 0.0
    %1715 = vmatpush1.msra.mxu0 0.0
    %1716 = vmatprep.subr.mxu0 0.0
    %1717 = vmatpush1.msra.mxu0 0.0
    %1718 = vmatprep.subr.mxu0 0.0
    %1719 = vmatpush1.msra.mxu0 0.0
    %1720 = vmatprep.subr.mxu0 0.0
    %1721 = vmatpush1.msra.mxu0 0.0
    %1722 = vmatprep.subr.mxu0 0.0
    %1723 = vmatpush1.msra.mxu0 0.0
    %1724 = vmatprep.subr.mxu0 0.0
    %1725 = vmatpush1.msra.mxu0 0.0
    %1726 = vmatprep.subr.mxu0 0.0
    %1727 = vmatpush1.msra.mxu0 0.0
    %1728 = vmatprep.mubr.f32.mxu0 0.0
    %1729 = vmatmul.mubr.f32.gmra.mrb[0].mxu0 %v1662
    %v1730 = vpop.f32.mrb[0].mxu0
    %v1731 = vadd.f32 0.0, %v1730
    %v1732 = vpop.f32.mrb[0].mxu0
    %1733 = vdwg.mxu0
    %v1735 = vsel %vm1222, %v1221, 0
    %1737 = vmatprep.subr.mxu0 0.0
    %1738 = vmatpush1.msra.mxu0 %v513
    %1739 = vmatprep.subr.mxu0 0.0
    %1740 = vmatpush1.msra.mxu0 0.0
    %1741 = vmatprep.subr.mxu0 0.0
    %1742 = vmatpush1.msra.mxu0 0.0
    %1743 = vmatprep.subr.mxu0 0.0
    %1744 = vmatpush1.msra.mxu0 0.0
    %1745 = vmatprep.subr.mxu0 0.0
    %1746 = vmatpush1.msra.mxu0 0.0
    %1747 = vmatprep.subr.mxu0 0.0
    %1748 = vmatpush1.msra.mxu0 0.0
    %1749 = vmatprep.subr.mxu0 0.0
    %1750 = vmatpush1.msra.mxu0 0.0
    %1751 = vmatprep.subr.mxu0 0.0
    %1752 = vmatpush1.msra.mxu0 0.0
    %1753 = vmatprep.subr.mxu0 0.0
    %1754 = vmatpush1.msra.mxu0 0.0
    %1755 = vmatprep.subr.mxu0 0.0
    %1756 = vmatpush1.msra.mxu0 0.0
    %1757 = vmatprep.subr.mxu0 0.0
    %1758 = vmatpush1.msra.mxu0 0.0
    %1759 = vmatprep.subr.mxu0 0.0
    %1760 = vmatpush1.msra.mxu0 0.0
    %1761 = vmatprep.subr.mxu0 0.0
    %1762 = vmatpush1.msra.mxu0 0.0
    %1763 = vmatprep.subr.mxu0 0.0
    %1764 = vmatpush1.msra.mxu0 0.0
    %1765 = vmatprep.subr.mxu0 0.0
    %1766 = vmatpush1.msra.mxu0 0.0
    %1767 = vmatprep.subr.mxu0 0.0
    %1768 = vmatpush1.msra.mxu0 0.0
    %1769 = vmatprep.subr.mxu0 0.0
    %1770 = vmatpush1.msra.mxu0 0.0
    %1771 = vmatprep.subr.mxu0 0.0
    %1772 = vmatpush1.msra.mxu0 0.0
    %1773 = vmatprep.subr.mxu0 0.0
    %1774 = vmatpush1.msra.mxu0 0.0
    %1775 = vmatprep.subr.mxu0 0.0
    %1776 = vmatpush1.msra.mxu0 0.0
    %1777 = vmatprep.subr.mxu0 0.0
    %1778 = vmatpush1.msra.mxu0 0.0
    %1779 = vmatprep.subr.mxu0 0.0
    %1780 = vmatpush1.msra.mxu0 0.0
    %1781 = vmatprep.subr.mxu0 0.0
    %1782 = vmatpush1.msra.mxu0 0.0
    %1783 = vmatprep.subr.mxu0 0.0
    %1784 = vmatpush1.msra.mxu0 0.0
    %1785 = vmatprep.subr.mxu0 0.0
    %1786 = vmatpush1.msra.mxu0 0.0
    %1787 = vmatprep.subr.mxu0 0.0
    %1788 = vmatpush1.msra.mxu0 0.0
    %1789 = vmatprep.subr.mxu0 0.0
    %1790 = vmatpush1.msra.mxu0 0.0
    %1791 = vmatprep.subr.mxu0 0.0
    %1792 = vmatpush1.msra.mxu0 0.0
    %1793 = vmatprep.subr.mxu0 0.0
    %1794 = vmatpush1.msra.mxu0 0.0
    %1795 = vmatprep.subr.mxu0 0.0
    %1796 = vmatpush1.msra.mxu0 0.0
    %1797 = vmatprep.subr.mxu0 0.0
    %1798 = vmatpush1.msra.mxu0 0.0
    %1799 = vmatprep.subr.mxu0 0.0
    %1800 = vmatpush1.msra.mxu0 0.0
    %1801 = vmatprep.mubr.f32.mxu0 0.0
    %1802 = vmatmul.mubr.f32.gmra.mrb[0].mxu0 %v1735
    %v1803 = vpop.f32.mrb[0].mxu0
    %v1804 = vadd.f32 0.0, %v1803
    %v1805 = vpop.f32.mrb[0].mxu0
    %1806 = vdwg.mxu0
    %v1815 = vrot.slane %v1366, 7
    %vm1816 = vcmask 1041409
    %v1817 = vsel %vm1816, %v1815, %v1293
    %v1818 = vrot.slane %v1439, 6
    %vm1819 = vcmask 1042434
    %v1820 = vsel %vm1819, %v1818, %v1817
    %v1821 = vrot.slane %v1512, 5
    %vm1822 = vcmask 1043459
    %v1823 = vsel %vm1822, %v1821, %v1820
    %v1824 = vrot.slane %v1585, 4
    %vm1825 = vcmask 1044484
    %v1826 = vsel %vm1825, %v1824, %v1823
    %v1827 = vrot.slane %v1658, 3
    %vm1828 = vcmask 1045509
    %v1829 = vsel %vm1828, %v1827, %v1826
    %v1830 = vrot.slane %v1731, 2
    %vm1831 = vcmask 1046534
    %v1832 = vsel %vm1831, %v1830, %v1829
    %v1833 = vrot.slane %v1804, 1
    %vm1834 = vcmask 1047559
    %v1835 = vsel %vm1834, %v1833, %v1832
    %v1837 = vld [vmem:[#allocation6] sm:$0xff]
    %v1838 = vld [vmem:[#allocation6 + $0x8] sm:$0xff]
    %v1839 = vld [vmem:[#allocation6 + $0x10] sm:$0xff]
    %v1840 = vld [vmem:[#allocation6 + $0x18] sm:$0xff]
    %v1841 = vld [vmem:[#allocation6 + $0x20] sm:$0xff]
    %v1842 = vld [vmem:[#allocation6 + $0x28] sm:$0xff]
    %v1843 = vld [vmem:[#allocation6 + $0x30] sm:$0xff]
    %v1844 = vld [vmem:[#allocation6 + $0x38] sm:$0xff]
    %v1845 = vld [vmem:[#allocation6 + $0x40] sm:$0xff]
    %v1846 = vld [vmem:[#allocation6 + $0x48] sm:$0xff]
    %v1847 = vld [vmem:[#allocation6 + $0x50] sm:$0xff]
    %v1848 = vld [vmem:[#allocation6 + $0x58] sm:$0xff]
    %v1849 = vld [vmem:[#allocation6 + $0x60] sm:$0xff]
    %v1850 = vld [vmem:[#allocation6 + $0x68] sm:$0xff]
    %v1851 = vld [vmem:[#allocation6 + $0x70] sm:$0xff]
    %v1852 = vld [vmem:[#allocation6 + $0x78] sm:$0xff]
    %v1853 = vld [vmem:[#allocation6 + $0x80] sm:$0xff]
    %v1854 = vld [vmem:[#allocation6 + $0x88] sm:$0xff]
    %v1855 = vld [vmem:[#allocation6 + $0x90] sm:$0xff]
    %v1856 = vld [vmem:[#allocation6 + $0x98] sm:$0xff]
    %v1857 = vld [vmem:[#allocation6 + $0xa0] sm:$0xff]
    %v1858 = vld [vmem:[#allocation6 + $0xa8] sm:$0xff]
    %v1859 = vld [vmem:[#allocation6 + $0xb0] sm:$0xff]
    %v1860 = vld [vmem:[#allocation6 + $0xb8] sm:$0xff]
    %v1861 = vld [vmem:[#allocation6 + $0xc0] sm:$0xff]
    %v1862 = vld [vmem:[#allocation6 + $0xc8] sm:$0xff]
    %v1863 = vld [vmem:[#allocation6 + $0xd0] sm:$0xff]
    %v1864 = vld [vmem:[#allocation6 + $0xd8] sm:$0xff]
    %v1865 = vld [vmem:[#allocation6 + $0xe0] sm:$0xff]
    %v1866 = vld [vmem:[#allocation6 + $0xe8] sm:$0xff]
    %v1867 = vld [vmem:[#allocation6 + $0xf0] sm:$0xff]
    %v1868 = vld [vmem:[#allocation6 + $0xf8] sm:$0xff]
    %v1869 = vld [vmem:[%s8] sm:$0x1]
    %v1871 = vlaneseq
    %v1872 = vshrl.u32 %v1871, 7
    %v1873 = vsub.s32 0, %v1872
    %v1874 = vrot.slane %v1869, %v1873
    %1876 = vmatprep.subr.mxu0 0.0
    %1877 = vmatpush1.msra.mxu0 %v1837
    %1878 = vmatprep.subr.mxu0 0.0
    %1879 = vmatpush1.msra.mxu0 %v1838
    %1880 = vmatprep.subr.mxu0 0.0
    %1881 = vmatpush1.msra.mxu0 %v1839
    %1882 = vmatprep.subr.mxu0 0.0
    %1883 = vmatpush1.msra.mxu0 %v1840
    %1884 = vmatprep.subr.mxu0 0.0
    %1885 = vmatpush1.msra.mxu0 %v1841
    %1886 = vmatprep.subr.mxu0 0.0
    %1887 = vmatpush1.msra.mxu0 %v1842
    %1888 = vmatprep.subr.mxu0 0.0
    %1889 = vmatpush1.msra.mxu0 %v1843
    %1890 = vmatprep.subr.mxu0 0.0
    %1891 = vmatpush1.msra.mxu0 %v1844
    %1892 = vmatprep.subr.mxu0 0.0
    %1893 = vmatpush1.msra.mxu0 %v1845
    %1894 = vmatprep.subr.mxu0 0.0
    %1895 = vmatpush1.msra.mxu0 %v1846
    %1896 = vmatprep.subr.mxu0 0.0
    %1897 = vmatpush1.msra.mxu0 %v1847
    %1898 = vmatprep.subr.mxu0 0.0
    %1899 = vmatpush1.msra.mxu0 %v1848
    %1900 = vmatprep.subr.mxu0 0.0
    %1901 = vmatpush1.msra.mxu0 %v1849
    %1902 = vmatprep.subr.mxu0 0.0
    %1903 = vmatpush1.msra.mxu0 %v1850
    %1904 = vmatprep.subr.mxu0 0.0
    %1905 = vmatpush1.msra.mxu0 %v1851
    %1906 = vmatprep.subr.mxu0 0.0
    %1907 = vmatpush1.msra.mxu0 %v1852
    %1908 = vmatprep.subr.mxu0 0.0
    %1909 = vmatpush1.msra.mxu0 %v1853
    %1910 = vmatprep.subr.mxu0 0.0
    %1911 = vmatpush1.msra.mxu0 %v1854
    %1912 = vmatprep.subr.mxu0 0.0
    %1913 = vmatpush1.msra.mxu0 %v1855
    %1914 = vmatprep.subr.mxu0 0.0
    %1915 = vmatpush1.msra.mxu0 %v1856
    %1916 = vmatprep.subr.mxu0 0.0
    %1917 = vmatpush1.msra.mxu0 %v1857
    %1918 = vmatprep.subr.mxu0 0.0
    %1919 = vmatpush1.msra.mxu0 %v1858
    %1920 = vmatprep.subr.mxu0 0.0
    %1921 = vmatpush1.msra.mxu0 %v1859
    %1922 = vmatprep.subr.mxu0 0.0
    %1923 = vmatpush1.msra.mxu0 %v1860
    %1924 = vmatprep.subr.mxu0 0.0
    %1925 = vmatpush1.msra.mxu0 %v1861
    %1926 = vmatprep.subr.mxu0 0.0
    %1927 = vmatpush1.msra.mxu0 %v1862
    %1928 = vmatprep.subr.mxu0 0.0
    %1929 = vmatpush1.msra.mxu0 %v1863
    %1930 = vmatprep.subr.mxu0 0.0
    %1931 = vmatpush1.msra.mxu0 %v1864
    %1932 = vmatprep.subr.mxu0 0.0
    %1933 = vmatpush1.msra.mxu0 %v1865
    %1934 = vmatprep.subr.mxu0 0.0
    %1935 = vmatpush1.msra.mxu0 %v1866
    %1936 = vmatprep.subr.mxu0 0.0
    %1937 = vmatpush1.msra.mxu0 %v1867
    %1938 = vmatprep.subr.mxu0 0.0
    %1939 = vmatpush1.msra.mxu0 %v1868
    %1940 = vmatprep.mubr.f32.mxu0 %v1835
    %1941 = vmatmul.mubr.f32.gmra.mrb[0].mxu0 %v505
    %v1942 = vpop.f32.mrb[0].mxu0
    %v1943 = vadd.f32 %v1874, %v1942
    %v1944 = vpop.f32.mrb[0].mxu0
    %1945 = vdwg.mxu0
    %v1946 = vtanh.pop %v1943
    %v1947 = vld [vmem:[%s9] sm:$0xff]
    %v1948 = vld [vmem:[%s9 + $0x8] sm:$0xff]
    %v1949 = vld [vmem:[%s9 + $0x10] sm:$0xff]
    %v1950 = vld [vmem:[%s9 + $0x18] sm:$0xff]
    %v1951 = vld [vmem:[%s9 + $0x20] sm:$0xff]
    %v1952 = vld [vmem:[%s9 + $0x28] sm:$0xff]
    %v1953 = vld [vmem:[%s9 + $0x30] sm:$0xff]
    %v1954 = vld [vmem:[%s9 + $0x38] sm:$0xff]
    %v1955 = vld [vmem:[%s9 + $0x40] sm:$0xff]
    %v1956 = vld [vmem:[%s9 + $0x48] sm:$0xff]
    %v1957 = vld [vmem:[%s9 + $0x50] sm:$0xff]
    %v1958 = vld [vmem:[%s9 + $0x58] sm:$0xff]
    %v1959 = vld [vmem:[%s9 + $0x60] sm:$0xff]
    %v1960 = vld [vmem:[%s9 + $0x68] sm:$0xff]
    %v1961 = vld [vmem:[%s9 + $0x70] sm:$0xff]
    %v1962 = vld [vmem:[%s9 + $0x78] sm:$0xff]
    %v1963 = vld [vmem:[%s10] sm:$0x1]
    %v1965 = vlaneseq
    %v1966 = vshrl.u32 %v1965, 7
    %v1967 = vsub.s32 0, %v1966
    %v1968 = vrot.slane %v1963, %v1967
    %1970 = vmatprep.subr.mxu0 0.0
    %1971 = vmatpush1.msra.mxu0 %v1947
    %1972 = vmatprep.subr.mxu0 0.0
    %1973 = vmatpush1.msra.mxu0 %v1948
    %1974 = vmatprep.subr.mxu0 0.0
    %1975 = vmatpush1.msra.mxu0 %v1949
    %1976 = vmatprep.subr.mxu0 0.0
    %1977 = vmatpush1.msra.mxu0 %v1950
    %1978 = vmatprep.subr.mxu0 0.0
    %1979 = vmatpush1.msra.mxu0 %v1951
    %1980 = vmatprep.subr.mxu0 0.0
    %1981 = vmatpush1.msra.mxu0 %v1952
    %1982 = vmatprep.subr.mxu0 0.0
    %1983 = vmatpush1.msra.mxu0 %v1953
    %1984 = vmatprep.subr.mxu0 0.0
    %1985 = vmatpush1.msra.mxu0 %v1954
    %1986 = vmatprep.subr.mxu0 0.0
    %1987 = vmatpush1.msra.mxu0 %v1955
    %1988 = vmatprep.subr.mxu0 0.0
    %1989 = vmatpush1.msra.mxu0 %v1956
    %1990 = vmatprep.subr.mxu0 0.0
    %1991 = vmatpush1.msra.mxu0 %v1957
    %1992 = vmatprep.subr.mxu0 0.0
    %1993 = vmatpush1.msra.mxu0 %v1958
    %1994 = vmatprep.subr.mxu0 0.0
    %1995 = vmatpush1.msra.mxu0 %v1959
    %1996 = vmatprep.subr.mxu0 0.0
    %1997 = vmatpush1.msra.mxu0 %v1960
    %1998 = vmatprep.subr.mxu0 0.0
    %1999 = vmatpush1.msra.mxu0 %v1961
    %2000 = vmatprep.subr.mxu0 0.0
    %2001 = vmatpush1.msra.mxu0 %v1962
    %2002 = vmatprep.subr.mxu0 0.0
    %2003 = vmatpush1.msra.mxu0 0.0
    %2004 = vmatprep.subr.mxu0 0.0
    %2005 = vmatpush1.msra.mxu0 0.0
    %2006 = vmatprep.subr.mxu0 0.0
    %2007 = vmatpush1.msra.mxu0 0.0
    %2008 = vmatprep.subr.mxu0 0.0
    %2009 = vmatpush1.msra.mxu0 0.0
    %2010 = vmatprep.subr.mxu0 0.0
    %2011 = vmatpush1.msra.mxu0 0.0
    %2012 = vmatprep.subr.mxu0 0.0
    %2013 = vmatpush1.msra.mxu0 0.0
    %2014 = vmatprep.subr.mxu0 0.0
    %2015 = vmatpush1.msra.mxu0 0.0
    %2016 = vmatprep.subr.mxu0 0.0
    %2017 = vmatpush1.msra.mxu0 0.0
    %2018 = vmatprep.subr.mxu0 0.0
    %2019 = vmatpush1.msra.mxu0 0.0
    %2020 = vmatprep.subr.mxu0 0.0
    %2021 = vmatpush1.msra.mxu0 0.0
    %2022 = vmatprep.subr.mxu0 0.0
    %2023 = vmatpush1.msra.mxu0 0.0
    %2024 = vmatprep.subr.mxu0 0.0
    %2025 = vmatpush1.msra.mxu0 0.0
    %2026 = vmatprep.subr.mxu0 0.0
    %2027 = vmatpush1.msra.mxu0 0.0
    %2028 = vmatprep.subr.mxu0 0.0
    %2029 = vmatpush1.msra.mxu0 0.0
    %2030 = vmatprep.subr.mxu0 0.0
    %2031 = vmatpush1.msra.mxu0 0.0
    %2032 = vmatprep.subr.mxu0 0.0
    %2033 = vmatpush1.msra.mxu0 0.0
    %2034 = vmatprep.mubr.f32.mxu0 0.0
    %2035 = vmatmul.mubr.f32.gmra.mrb[0].mxu0 %v1946
    %v2036 = vpop.f32.mrb[0].mxu0
    %v2037 = vadd.f32 %v1968, %v2036
    %v2038 = vpop.f32.mrb[0].mxu0
    %2039 = vdwg.mxu0
    %2040 = vmax.xlane.f32.xlu0 %v2037
    %v2041 = vpop.xlane.xlu0 %2040
    %v2042 = vsub.f32 %v2037, %v2041
    %v2043 = vmul.f32 %v2042, 1.442695
    %v2044 = vpow.pop %v2043
    %2045 = vadd.xlane.f32.xlu0 %v2044
    %v2046 = vpop.xlane.xlu0 %2045
    %v2047 = vrcp.pop %v2046
    %v2048 = vmul.f32 %v2044, %v2047
    %2049 = vst [vmem:[%s11] sm:$0xff] %v2048
    %2050 = vst [vmem:[%s12] sm:$0xff] %v505
    // Predicated region
    $region58: #{_lambda_.1} parent=1 // pred_check
      _
    $region59: #{_lambda_.1} parent=1 // pred_check_branch
      %2052 = sbr.rel (0) target = $region61
    $region60: #{_lambda_.1} parent=1 // pred_region
      _
    $region61: #{_lambda_.1} parent=1 // pred_fallthru
      _
    // Predicated region
    $region62: #{_lambda_.1} parent=1 // pred_check
      _
    $region63: #{_lambda_.1} parent=1 // pred_check_branch
      %2054 = sbr.rel (0) target = $region65
    $region64: #{_lambda_.1} parent=1 // pred_region
      _
    $region65: #{_lambda_.1} parent=1 // pred_fallthru
      _
    // Predicated region
    $region66: #{_lambda_.1} parent=1 // pred_check
      _
    $region67: #{_lambda_.1} parent=1 // pred_check_branch
      %2056 = sbr.rel (0) target = $region69
    $region68: #{_lambda_.1} parent=1 // pred_region
      _
    $region69: #{_lambda_.1} parent=1 // pred_fallthru
      _
    // Predicated region
    $region70: #{_lambda_.1} parent=1 // pred_check
      _
    $region71: #{_lambda_.1} parent=1 // pred_check_branch
      %2058 = sbr.rel (0) target = $region73
    $region72: #{_lambda_.1} parent=1 // pred_region
      _
    $region73: #{_lambda_.1} parent=1 // pred_fallthru
      _
    %2059 = vsyncpa [#allocation3], 1
    %2060 = vsyncpa [#allocation5], 1

</llo_original>
